<compile_context>
chip_gen: v5e
topology: v5e:2x2
jax: 0.10.0
libtpu: 0.0.40
codegen_flags: <defaults>
</compile_context>

<pallas_src>
import functools

import jax
import jax.numpy as jnp
from jax import lax
from jax.experimental import pallas as pl
from jax.experimental.pallas import tpu as pltpu

_VMEM_LIMIT = 32 * 1024 * 1024


# ----------------------------- Pallas kernels ------------------------------

def _mm_bias_act_kernel(x_ref, w_ref, b_ref, o_ref, *, relu):
    # (TM,K)@(K,N) + shift [+ relu]   (BN scale already folded into w)
    acc = jnp.dot(x_ref[...], w_ref[...], preferred_element_type=jnp.float32)
    acc = acc + b_ref[...]
    if relu:
        acc = jnp.maximum(acc, 0.0)
    o_ref[...] = acc.astype(o_ref.dtype)


def _mm_res_relu_kernel(x_ref, w_ref, b_ref, r_ref, o_ref):
    # conv3 + bn3 + identity + relu (identity supplied as a tile)
    acc = jnp.dot(x_ref[...], w_ref[...], preferred_element_type=jnp.float32)
    acc = acc + b_ref[...] + r_ref[...].astype(jnp.float32)
    o_ref[...] = jnp.maximum(acc, 0.0).astype(o_ref.dtype)


def _mm_down_res_relu_kernel(y_ref, w3_ref, x_ref, wd_ref, b_ref, o_ref):
    # conv3 + bn3 + (downsample 1x1 conv + bn) + add + relu, all fused.
    acc = jnp.dot(y_ref[...], w3_ref[...], preferred_element_type=jnp.float32)
    acc = acc + jnp.dot(x_ref[...], wd_ref[...],
                        preferred_element_type=jnp.float32)
    acc = acc + b_ref[...]
    o_ref[...] = jnp.maximum(acc, 0.0).astype(o_ref.dtype)


def _conv3x3_bn_relu_kernel(x_ref, w_ref, b_ref, o_ref, *, th, wo, dil):
    # x_ref: (Hp, Wp, Cb)  padded activation of one image (VMEM resident,
    #        fetched once per image since its block index ignores the h axis).
    # w_ref: (9, Cb, Cb)   per-tap block-diagonal (grouped) weights, BN folded.
    # b_ref: (1, Cb)       BN shift.
    # o_ref: (th, wo, Cb)  output rows [h0, h0+th) of this image.
    cb = w_ref.shape[-1]
    h0 = pl.program_id(1) * th
    acc = jnp.zeros((th * wo, cb), jnp.float32)
    for kh in range(3):
        for kw in range(3):
            win = x_ref[pl.ds(h0 + kh * dil, th), pl.ds(kw * dil, wo), :]
            acc = acc + jnp.dot(win.reshape(th * wo, cb),
                                w_ref[kh * 3 + kw],
                                preferred_element_type=jnp.float32)
    acc = jnp.maximum(acc + b_ref[...], 0.0)
    o_ref[...] = acc.reshape(th, wo, cb).astype(o_ref.dtype)


# ----------------------------- Pallas wrappers -----------------------------

def matmul_bias_act(x, w, b, *, relu, out_dtype, tm=512):
    M, K = x.shape
    N = w.shape[1]
    tm = min(tm, M)
    cost = pl.CostEstimate(
        flops=int(2 * M * K * N), transcendentals=0,
        bytes_accessed=int(M * K * x.dtype.itemsize + K * N * w.dtype.itemsize
                           + M * N * jnp.dtype(out_dtype).itemsize + N * 4))
    return pl.pallas_call(
        functools.partial(_mm_bias_act_kernel, relu=relu),
        out_shape=jax.ShapeDtypeStruct((M, N), out_dtype),
        grid=(pl.cdiv(M, tm),),
        in_specs=[
            pl.BlockSpec((tm, K), lambda i: (i, 0)),
            pl.BlockSpec((K, N), lambda i: (0, 0)),
            pl.BlockSpec((1, N), lambda i: (0, 0)),
        ],
        out_specs=pl.BlockSpec((tm, N), lambda i: (i, 0)),
        compiler_params=pltpu.CompilerParams(
            dimension_semantics=("parallel",), vmem_limit_bytes=_VMEM_LIMIT),
        cost_estimate=cost,
    )(x, w, b)


def conv3_downsample_res_relu(y2, w3, xd, wd, b, *, out_dtype, tm=512):
    M, K3 = y2.shape
    Kd = xd.shape[1]
    N = w3.shape[1]
    tm = min(tm, M)
    cost = pl.CostEstimate(
        flops=int(2 * M * (K3 + Kd) * N), transcendentals=0,
        bytes_accessed=int(M * K3 * y2.dtype.itemsize
                           + M * Kd * xd.dtype.itemsize
                           + (K3 + Kd) * N * w3.dtype.itemsize
                           + M * N * jnp.dtype(out_dtype).itemsize + N * 4))
    return pl.pallas_call(
        _mm_down_res_relu_kernel,
        out_shape=jax.ShapeDtypeStruct((M, N), out_dtype),
        grid=(pl.cdiv(M, tm),),
        in_specs=[
            pl.BlockSpec((tm, K3), lambda i: (i, 0)),
            pl.BlockSpec((K3, N), lambda i: (0, 0)),
            pl.BlockSpec((tm, Kd), lambda i: (i, 0)),
            pl.BlockSpec((Kd, N), lambda i: (0, 0)),
            pl.BlockSpec((1, N), lambda i: (0, 0)),
        ],
        out_specs=pl.BlockSpec((tm, N), lambda i: (i, 0)),
        compiler_params=pltpu.CompilerParams(
            dimension_semantics=("parallel",), vmem_limit_bytes=_VMEM_LIMIT),
        cost_estimate=cost,
    )(y2, w3, xd, wd, b)


def conv3_res_relu(y2, w3, b, res, *, out_dtype, tm=512):
    M, K = y2.shape
    N = w3.shape[1]
    tm = min(tm, M)
    cost = pl.CostEstimate(
        flops=int(2 * M * K * N), transcendentals=0,
        bytes_accessed=int(M * K * y2.dtype.itemsize + K * N * w3.dtype.itemsize
                           + M * N * res.dtype.itemsize
                           + M * N * jnp.dtype(out_dtype).itemsize + N * 4))
    return pl.pallas_call(
        _mm_res_relu_kernel,
        out_shape=jax.ShapeDtypeStruct((M, N), out_dtype),
        grid=(pl.cdiv(M, tm),),
        in_specs=[
            pl.BlockSpec((tm, K), lambda i: (i, 0)),
            pl.BlockSpec((K, N), lambda i: (0, 0)),
            pl.BlockSpec((1, N), lambda i: (0, 0)),
            pl.BlockSpec((tm, N), lambda i: (i, 0)),
        ],
        out_specs=pl.BlockSpec((tm, N), lambda i: (i, 0)),
        compiler_params=pltpu.CompilerParams(
            dimension_semantics=("parallel",), vmem_limit_bytes=_VMEM_LIMIT),
        cost_estimate=cost,
    )(y2, w3, b, res)


def grouped_conv3x3_bn_relu(xpad, w_taps, b, *, ho, wo, dil, th, out_dtype):
    """xpad: (N, Hp, Wp, Cb) zero-padded (by dil) activation, bf16.
    w_taps: (9, Cb, Cb) block-diagonal per-tap weights (BN scale folded).
    Output: (N, ho, wo, Cb) = relu(grouped dilated 3x3 conv * bn)."""
    n, hp, wp, cb = xpad.shape
    cost = pl.CostEstimate(
        flops=int(2 * n * ho * wo * 9 * cb * cb), transcendentals=0,
        bytes_accessed=int(n * hp * wp * cb * xpad.dtype.itemsize
                           + 9 * cb * cb * w_taps.dtype.itemsize
                           + n * ho * wo * cb * jnp.dtype(out_dtype).itemsize))
    return pl.pallas_call(
        functools.partial(_conv3x3_bn_relu_kernel, th=th, wo=wo, dil=dil),
        out_shape=jax.ShapeDtypeStruct((n, ho, wo, cb), out_dtype),
        grid=(n, ho // th),
        in_specs=[
            # full padded image per batch index; block index ignores the h
            # axis so it is DMA'd only once per image.
            pl.BlockSpec((None, hp, wp, cb), lambda i, j: (i, 0, 0, 0)),
            pl.BlockSpec((9, cb, cb), lambda i, j: (0, 0, 0)),
            pl.BlockSpec((1, cb), lambda i, j: (0, 0)),
        ],
        out_specs=pl.BlockSpec((None, th, wo, cb), lambda i, j: (i, j, 0, 0)),
        compiler_params=pltpu.CompilerParams(
            dimension_semantics=("parallel", "parallel"),
            vmem_limit_bytes=_VMEM_LIMIT),
        cost_estimate=cost,
    )(xpad, w_taps, b)


def _pick_tile_h(ho, wo, max_rows=1024):
    """Largest divisor th of ho with th*wo <= max_rows (>=1)."""
    th = 1
    for cand in range(1, ho + 1):
        if ho % cand == 0 and cand * wo <= max_rows:
            th = cand
    return th


# ------------------------- parameters (deterministic) ----------------------

def init_bottleneck_params(key, in_channels, bottleneck_channels,
                           out_channels, num_groups):
    ks = jax.random.split(key, 8)

    def conv_w(k, co, ci, kh, kw):
        # kaiming_uniform_(a=1): bound = sqrt(6 / ((1 + a^2) * fan_in))
        fan_in = ci * kh * kw
        bound = (6.0 / (2.0 * fan_in)) ** 0.5
        return jax.random.uniform(k, (co, ci, kh, kw), jnp.float32,
                                  -bound, bound)

    def frozen_bn(k, c, eps=1e-5):
        k1, k2, k3, k4 = jax.random.split(k, 4)
        w = jax.random.uniform(k1, (c,), jnp.float32, 0.5, 1.5)
        b = jax.random.uniform(k2, (c,), jnp.float32, -0.5, 0.5)
        mean = jax.random.normal(k3, (c,), jnp.float32) * 0.1
        var = jax.random.uniform(k4, (c,), jnp.float32, 0.5, 1.5)
        scale = w / jnp.sqrt(var + eps)
        shift = b - mean * scale
        return scale, shift

    p = {}
    p['w1'] = conv_w(ks[0], bottleneck_channels, in_channels, 1, 1)
    p['bn1'] = frozen_bn(ks[1], bottleneck_channels)
    p['w2'] = conv_w(ks[2], bottleneck_channels,
                     bottleneck_channels // num_groups, 3, 3)
    p['bn2'] = frozen_bn(ks[3], bottleneck_channels)
    p['w3'] = conv_w(ks[4], out_channels, bottleneck_channels, 1, 1)
    p['bn3'] = frozen_bn(ks[5], out_channels)
    if in_channels != out_channels:
        p['wd'] = conv_w(ks[6], out_channels, in_channels, 1, 1)
        p['bnd'] = frozen_bn(ks[7], out_channels)
    return p


def prepare_bottleneck_params(params, num_groups):
    """One-time weight re-layout: fold BN scale into conv weights, transpose to
    (Cin, Cout), build per-tap block-diagonal grouped 3x3 weights, cast to
    bf16.  Done once, not per forward."""
    f32 = jnp.float32
    bf16 = jnp.bfloat16

    def fold_1x1(w_oihw, scale):
        co, ci = w_oihw.shape[:2]
        w2d = w_oihw.reshape(co, ci)
        return (w2d.T * scale[None, :]).astype(bf16)        # (Cin, Cout)

    s1, b1 = params['bn1']
    s2, b2 = params['bn2']
    s3, b3 = params['bn3']

    prep = {}
    prep['w1'] = fold_1x1(params['w1'], s1)
    prep['b1'] = b1.reshape(1, -1).astype(f32)

    # grouped 3x3 -> (9, Cb, Cb) block-diagonal per tap (lane-dense output).
    w2 = params['w2']                                       # (Cb, Cg, 3, 3)
    cb = w2.shape[0]
    cg = cb // num_groups
    w2t = jnp.transpose(w2, (2, 3, 1, 0))                   # (3,3,Cg_in,Cb_out)
    w2bd = jnp.zeros((3, 3, cb, cb), f32)
    for g in range(num_groups):
        sl = slice(g * cg, (g + 1) * cg)
        w2bd = w2bd.at[:, :, sl, sl].set(w2t[:, :, :, sl])
    w2bd = w2bd * s2[None, None, None, :]
    prep['w2'] = w2bd.reshape(9, cb, cb).astype(bf16)
    prep['b2'] = b2.reshape(1, -1).astype(f32)

    prep['w3'] = fold_1x1(params['w3'], s3)
    if 'wd' in params:
        sd, bd = params['bnd']
        prep['wd'] = fold_1x1(params['wd'], sd)
        prep['b3'] = (b3 + bd).reshape(1, -1).astype(f32)   # merged shifts
    else:
        prep['b3'] = b3.reshape(1, -1).astype(f32)
    return prep


# ------------------------------- forward pass ------------------------------

@functools.partial(jax.jit,
                   static_argnames=("stride_in_1x1", "stride", "dilation"))
def bottleneck_forward_pallas(x_nchw, prep, *, stride_in_1x1, stride, dilation):
    N, Cin, H, W = x_nchw.shape
    x = jnp.transpose(x_nchw, (0, 2, 3, 1))                 # NHWC

    orig_stride = stride
    if dilation > 1:
        stride = 1
    stride_1x1, stride_3x3 = (stride, 1) if stride_in_1x1 else (1, stride)

    # ---- conv1 (1x1, stride_1x1) + bn1 + relu : tiled fused matmul ----
    # TODO(synk): stride of the 1x1 conv is an eager slice (fused by XLA under
    # jit) rather than being folded into the BlockSpec index_map.
    x1 = x[:, ::stride_1x1, ::stride_1x1, :] if stride_1x1 > 1 else x
    N1, H1, W1, _ = x1.shape
    Cb = prep['w1'].shape[1]
    x1f = x1.reshape(N1 * H1 * W1, Cin).astype(jnp.bfloat16)
    y1 = matmul_bias_act(x1f, prep['w1'], prep['b1'],
                         relu=True, out_dtype=jnp.bfloat16)
    y1 = y1.reshape(N1, H1, W1, Cb)

    # ---- conv2 (3x3 grouped, dilated) + bn2 + relu : 9-tap in-kernel acc ----
    d = dilation
    y1p = jnp.pad(y1, ((0, 0), (d, d), (d, d), (0, 0)))     # zero pad by d
    th = _pick_tile_h(H1, W1)
    y2 = grouped_conv3x3_bn_relu(y1p, prep['w2'], prep['b2'],
                                 ho=H1, wo=W1, dil=d, th=th,
                                 out_dtype=jnp.bfloat16)
    if stride_3x3 > 1:
        # TODO(synk): strided 3x3 is realized as stride-1 conv + subsample
        # (identical numerics, extra MXU work); fold stride into the kernel's
        # H/W windows for the stride_in_1x1=False configuration.
        y2 = y2[:, ::stride_3x3, ::stride_3x3, :]
    N2, Ho, Wo, _ = y2.shape
    M2 = N2 * Ho * Wo
    y2f = y2.reshape(M2, Cb)

    # ---- conv3 (1x1) + bn3 + identity/downsample + relu : fully fused ----
    Cout = prep['w3'].shape[1]
    if 'wd' in prep:
        down_stride = orig_stride if dilation == 1 else 1
        xd = x[:, ::down_stride, ::down_stride, :] if down_stride > 1 else x
        xdf = xd.reshape(-1, Cin).astype(jnp.bfloat16)
        assert xdf.shape[0] == M2, (xdf.shape, M2)
        out = conv3_downsample_res_relu(y2f, prep['w3'], xdf, prep['wd'],
                                        prep['b3'], out_dtype=jnp.float32)
    else:
        identity = x.reshape(-1, Cin)                       # Cin == Cout here
        assert identity.shape == (M2, Cout), (identity.shape, (M2, Cout))
        out = conv3_res_relu(y2f, prep['w3'], prep['b3'], identity,
                             out_dtype=jnp.float32)

    out = out.reshape(N2, Ho, Wo, Cout)
    return jnp.transpose(out, (0, 3, 1, 2))                 # NCHW


# --------------------------- pure-JAX reference -----------------------------

def bottleneck_forward_ref(x, params, *, num_groups, stride_in_1x1, stride,
                           dilation):
    def conv(x, w, s, p, d=1, groups=1):
        return lax.conv_general_dilated(
            x, w, window_strides=(s, s), padding=((p, p), (p, p)),
            rhs_dilation=(d, d), feature_group_count=groups,
            dimension_numbers=('NCHW', 'OIHW', 'NCHW'),
            precision=lax.Precision.HIGHEST)

    def bn(x, sb):
        s, b = sb
        return x * s[None, :, None, None] + b[None, :, None, None]

    orig_stride = stride
    if dilation > 1:
        stride = 1
    s1x1, s3x3 = (stride, 1) if stride_in_1x1 else (1, stride)
    out = jax.nn.relu(bn(conv(x, params['w1'], s1x1, 0), params['bn1']))
    out = jax.nn.relu(bn(conv(out, params['w2'], s3x3, dilation, dilation,
                              num_groups), params['bn2']))
    out = bn(conv(out, params['w3'], 1, 0), params['bn3'])
    if 'wd' in params:
        ds = orig_stride if dilation == 1 else 1
        identity = bn(conv(x, params['wd'], ds, 0), params['bnd'])
    else:
        identity = x
    return jax.nn.relu(out + identity)


# ----------------------------------- main -----------------------------------

if __name__ == "__main__":
    key = jax.random.PRNGKey(0)
    k_x, k_p = jax.random.split(key)

    # Module configuration (synthetic, small):
    N, Cin, H, W = 2, 32, 16, 16
    Cb, Cout, G = 16, 64, 2
    stride, dilation, stride_in_1x1 = 2, 1, True

    x = jax.random.normal(k_x, (N, Cin, H, W), jnp.float32)
    params = init_bottleneck_params(k_p, Cin, Cb, Cout, G)
    prep = prepare_bottleneck_params(params, num_groups=G)

    out = bottleneck_forward_pallas(x, prep, stride_in_1x1=stride_in_1x1,
                                    stride=stride, dilation=dilation)
    out = jax.block_until_ready(out)

    ref = bottleneck_forward_ref(x, params, num_groups=G,
                                 stride_in_1x1=stride_in_1x1,
                                 stride=stride, dilation=dilation)
    assert out.shape == ref.shape, (out.shape, ref.shape)
    # bf16 operands (f32 accumulation) vs. f32 reference -> slightly relaxed
    # relative-to-max tolerance.
    rel_err = float(jnp.max(jnp.abs(out - ref)) /
                    (jnp.max(jnp.abs(ref)) + 1e-6))
    assert rel_err < 3e-2, rel_err
    print("KERNEL_OK")
</pallas_src>

<mosaic_0001>
module attributes {stable_mosaic.version = 11 : i64} {
  func.func @_mm_bias_act_kernel(%arg0: i32, %arg1: memref<128x32xbf16, #tpu.memory_space<vmem>>, %arg2: memref<32x16xbf16, #tpu.memory_space<vmem>>, %arg3: memref<1x16xf32, #tpu.memory_space<vmem>>, %arg4: memref<128x16xbf16, #tpu.memory_space<vmem>>) attributes {dimension_semantics = [#tpu.dimension_semantics<parallel>], iteration_bounds = array<i64: 1>, scalar_prefetch = 0 : i64, scratch_operands = 0 : i64, tpu.core_type = #tpu.core_type<tc>, window_params = [{transform_indices = @transform_0, window_bounds = array<i64: 128, 32>}, {pipeline_mode = #tpu.pipeline_mode<synchronous>, transform_indices = @transform_1, window_bounds = array<i64: 32, 16>}, {pipeline_mode = #tpu.pipeline_mode<synchronous>, transform_indices = @transform_2, window_bounds = array<i64: 1, 16>}, {transform_indices = @transform_3, window_bounds = array<i64: 128, 16>}]} {
    %c0 = arith.constant 0 : index
    %c0_0 = arith.constant 0 : index
    %0 = vector.load %arg1[%c0, %c0_0] : memref<128x32xbf16, #tpu.memory_space<vmem>>, vector<128x32xbf16>
    %c0_1 = arith.constant 0 : index
    %c0_2 = arith.constant 0 : index
    %1 = vector.load %arg2[%c0_1, %c0_2] : memref<32x16xbf16, #tpu.memory_space<vmem>>, vector<32x16xbf16>
    %cst = arith.constant dense<0.000000e+00> : vector<128x16xf32>
    %2 = tpu.matmul %0, %1, %cst {dimension_numbers = #tpu.dot_dimension_numbers<[1], [0], [0], [1], [0, 0, 1, 1], [], []>} : vector<128x32xbf16>, vector<32x16xbf16>, vector<128x16xf32> -> vector<128x16xf32>
    %c0_3 = arith.constant 0 : index
    %c0_4 = arith.constant 0 : index
    %3 = vector.load %arg3[%c0_3, %c0_4] : memref<1x16xf32, #tpu.memory_space<vmem>>, vector<1x16xf32>
    %4 = vector.broadcast %3 : vector<1x16xf32> to vector<128x16xf32>
    %5 = arith.addf %2, %4 : vector<128x16xf32>
    %cst_5 = arith.constant 0.000000e+00 : f32
    %6 = vector.broadcast %cst_5 : f32 to vector<128x16xf32>
    %7 = arith.maximumf %5, %6 : vector<128x16xf32>
    %8 = arith.truncf %7 : vector<128x16xf32> to vector<128x16xbf16>
    %c0_6 = arith.constant 0 : index
    %c0_7 = arith.constant 0 : index
    %9 = vector.load %arg4[%c0_6, %c0_7] : memref<128x16xbf16, #tpu.memory_space<vmem>>, vector<128x16xbf16>
    tpu.vector_store %arg4[%c0_6, %c0_7], %8 {strides = array<i32>} : memref<128x16xbf16, #tpu.memory_space<vmem>>, vector<128x16xbf16>,
    return
  }
  func.func @transform_0(%arg0: i32) -> (i32, i32) {
    %c0_i32 = arith.constant 0 : i32
    %c0_i32_0 = arith.constant 0 : i32
    return %arg0, %c0_i32 : i32, i32
  }
  func.func @transform_1(%arg0: i32) -> (i32, i32) {
    %c0_i32 = arith.constant 0 : i32
    %c0_i32_0 = arith.constant 0 : i32
    %c0_i32_1 = arith.constant 0 : i32
    return %c0_i32, %c0_i32_0 : i32, i32
  }
  func.func @transform_2(%arg0: i32) -> (i32, i32) {
    %c0_i32 = arith.constant 0 : i32
    %c0_i32_0 = arith.constant 0 : i32
    %c0_i32_1 = arith.constant 0 : i32
    return %c0_i32, %c0_i32_0 : i32, i32
  }
  func.func @transform_3(%arg0: i32) -> (i32, i32) {
    %c0_i32 = arith.constant 0 : i32
    %c0_i32_0 = arith.constant 0 : i32
    return %arg0, %c0_i32 : i32, i32
  }
}

module attributes {stable_mosaic.version = 11 : i64} {
  func.func @_mm_down_res_relu_kernel(%arg0: i32, %arg1: memref<128x16xbf16, #tpu.memory_space<vmem>>, %arg2: memref<16x64xbf16, #tpu.memory_space<vmem>>, %arg3: memref<128x32xbf16, #tpu.memory_space<vmem>>, %arg4: memref<32x64xbf16, #tpu.memory_space<vmem>>, %arg5: memref<1x64xf32, #tpu.memory_space<vmem>>, %arg6: memref<128x64xf32, #tpu.memory_space<vmem>>) attributes {dimension_semantics = [#tpu.dimension_semantics<parallel>], iteration_bounds = array<i64: 1>, scalar_prefetch = 0 : i64, scratch_operands = 0 : i64, tpu.core_type = #tpu.core_type<tc>, window_params = [{transform_indices = @transform_0, window_bounds = array<i64: 128, 16>}, {pipeline_mode = #tpu.pipeline_mode<synchronous>, transform_indices = @transform_1, window_bounds = array<i64: 16, 64>}, {transform_indices = @transform_2, window_bounds = array<i64: 128, 32>}, {pipeline_mode = #tpu.pipeline_mode<synchronous>, transform_indices = @transform_3, window_bounds = array<i64: 32, 64>}, {pipeline_mode = #tpu.pipeline_mode<synchronous>, transform_indices = @transform_4, window_bounds = array<i64: 1, 64>}, {transform_indices = @transform_5, window_bounds = array<i64: 128, 64>}]} {
    %c0 = arith.constant 0 : index
    %c0_0 = arith.constant 0 : index
    %0 = vector.load %arg1[%c0, %c0_0] : memref<128x16xbf16, #tpu.memory_space<vmem>>, vector<128x16xbf16>
    %c0_1 = arith.constant 0 : index
    %c0_2 = arith.constant 0 : index
    %1 = vector.load %arg2[%c0_1, %c0_2] : memref<16x64xbf16, #tpu.memory_space<vmem>>, vector<16x64xbf16>
    %cst = arith.constant dense<0.000000e+00> : vector<128x64xf32>
    %2 = tpu.matmul %0, %1, %cst {dimension_numbers = #tpu.dot_dimension_numbers<[1], [0], [0], [1], [0, 0, 1, 1], [], []>} : vector<128x16xbf16>, vector<16x64xbf16>, vector<128x64xf32> -> vector<128x64xf32>
    %c0_3 = arith.constant 0 : index
    %c0_4 = arith.constant 0 : index
    %3 = vector.load %arg3[%c0_3, %c0_4] : memref<128x32xbf16, #tpu.memory_space<vmem>>, vector<128x32xbf16>
    %c0_5 = arith.constant 0 : index
    %c0_6 = arith.constant 0 : index
    %4 = vector.load %arg4[%c0_5, %c0_6] : memref<32x64xbf16, #tpu.memory_space<vmem>>, vector<32x64xbf16>
    %cst_7 = arith.constant dense<0.000000e+00> : vector<128x64xf32>
    %5 = tpu.matmul %3, %4, %cst_7 {dimension_numbers = #tpu.dot_dimension_numbers<[1], [0], [0], [1], [0, 0, 1, 1], [], []>} : vector<128x32xbf16>, vector<32x64xbf16>, vector<128x64xf32> -> vector<128x64xf32>
    %6 = arith.addf %2, %5 : vector<128x64xf32>
    %c0_8 = arith.constant 0 : index
    %c0_9 = arith.constant 0 : index
    %7 = vector.load %arg5[%c0_8, %c0_9] : memref<1x64xf32, #tpu.memory_space<vmem>>, vector<1x64xf32>
    %8 = vector.broadcast %7 : vector<1x64xf32> to vector<128x64xf32>
    %9 = arith.addf %6, %8 : vector<128x64xf32>
    %cst_10 = arith.constant 0.000000e+00 : f32
    %10 = vector.broadcast %cst_10 : f32 to vector<128x64xf32>
    %11 = arith.maximumf %9, %10 : vector<128x64xf32>
    %c0_11 = arith.constant 0 : index
    %c0_12 = arith.constant 0 : index
    %12 = vector.load %arg6[%c0_11, %c0_12] : memref<128x64xf32, #tpu.memory_space<vmem>>, vector<128x64xf32>
    tpu.vector_store %arg6[%c0_11, %c0_12], %11 {strides = array<i32>} : memref<128x64xf32, #tpu.memory_space<vmem>>, vector<128x64xf32>,
    return
  }
  func.func @transform_0(%arg0: i32) -> (i32, i32) {
    %c0_i32 = arith.constant 0 : i32
    %c0_i32_0 = arith.constant 0 : i32
    return %arg0, %c0_i32 : i32, i32
  }
  func.func @transform_1(%arg0: i32) -> (i32, i32) {
    %c0_i32 = arith.constant 0 : i32
    %c0_i32_0 = arith.constant 0 : i32
    %c0_i32_1 = arith.constant 0 : i32
    return %c0_i32, %c0_i32_0 : i32, i32
  }
  func.func @transform_2(%arg0: i32) -> (i32, i32) {
    %c0_i32 = arith.constant 0 : i32
    %c0_i32_0 = arith.constant 0 : i32
    return %arg0, %c0_i32 : i32, i32
  }
  func.func @transform_3(%arg0: i32) -> (i32, i32) {
    %c0_i32 = arith.constant 0 : i32
    %c0_i32_0 = arith.constant 0 : i32
    %c0_i32_1 = arith.constant 0 : i32
    return %c0_i32, %c0_i32_0 : i32, i32
  }
  func.func @transform_4(%arg0: i32) -> (i32, i32) {
    %c0_i32 = arith.constant 0 : i32
    %c0_i32_0 = arith.constant 0 : i32
    %c0_i32_1 = arith.constant 0 : i32
    return %c0_i32, %c0_i32_0 : i32, i32
  }
  func.func @transform_5(%arg0: i32) -> (i32, i32) {
    %c0_i32 = arith.constant 0 : i32
    %c0_i32_0 = arith.constant 0 : i32
    return %arg0, %c0_i32 : i32, i32
  }
}

module attributes {stable_mosaic.version = 11 : i64} {
  func.func @_conv3x3_bn_relu_kernel(%arg0: i32, %arg1: i32, %arg2: memref<1x10x10x16xbf16, #tpu.memory_space<vmem>>, %arg3: memref<9x16x16xbf16, #tpu.memory_space<vmem>>, %arg4: memref<1x16xf32, #tpu.memory_space<vmem>>, %arg5: memref<1x8x8x16xbf16, #tpu.memory_space<vmem>>) attributes {dimension_semantics = [#tpu.dimension_semantics<parallel>, #tpu.dimension_semantics<parallel>], iteration_bounds = array<i64: 2, 1>, scalar_prefetch = 0 : i64, scratch_operands = 0 : i64, tpu.core_type = #tpu.core_type<tc>, window_params = [{transform_indices = @transform_0, window_bounds = array<i64: 1, 10, 10, 16>}, {pipeline_mode = #tpu.pipeline_mode<synchronous>, transform_indices = @transform_1, window_bounds = array<i64: 9, 16, 16>}, {pipeline_mode = #tpu.pipeline_mode<synchronous>, transform_indices = @transform_2, window_bounds = array<i64: 1, 16>}, {transform_indices = @transform_3, window_bounds = array<i64: 1, 8, 8, 16>}]} {
    %c8_i32 = arith.constant 8 : i32
    %0 = arith.muli %arg1, %c8_i32 : i32
    %cst = arith.constant 0.000000e+00 : f32
    %1 = vector.broadcast %cst : f32 to vector<64x16xf32>
    %c0_i32 = arith.constant 0 : i32
    %2 = arith.addi %0, %c0_i32 : i32
    %c0 = arith.constant 0 : index
    %3 = arith.index_cast %2 : i32 to index
    %c0_0 = arith.constant 0 : index
    %c0_1 = arith.constant 0 : index
    %4 = vector.load %arg2[%c0, %3, %c0_0, %c0_1] : memref<1x10x10x16xbf16, #tpu.memory_space<vmem>>, vector<1x8x8x16xbf16>
    %5 = vector.shape_cast %4 : vector<1x8x8x16xbf16> to vector<8x8x16xbf16>
    %6 = vector.shape_cast %5 : vector<8x8x16xbf16> to vector<64x16xbf16>
    %c0_2 = arith.constant 0 : index
    %c0_3 = arith.constant 0 : index
    %c0_4 = arith.constant 0 : index
    %7 = vector.load %arg3[%c0_2, %c0_3, %c0_4] : memref<9x16x16xbf16, #tpu.memory_space<vmem>>, vector<1x16x16xbf16>
    %8 = vector.shape_cast %7 : vector<1x16x16xbf16> to vector<16x16xbf16>
    %cst_5 = arith.constant dense<0.000000e+00> : vector<64x16xf32>
    %9 = tpu.matmul %6, %8, %cst_5 {dimension_numbers = #tpu.dot_dimension_numbers<[1], [0], [0], [1], [0, 0, 1, 1], [], []>} : vector<64x16xbf16>, vector<16x16xbf16>, vector<64x16xf32> -> vector<64x16xf32>
    %10 = arith.addf %1, %9 : vector<64x16xf32>
    %c0_i32_6 = arith.constant 0 : i32
    %11 = arith.addi %0, %c0_i32_6 : i32
    %c0_7 = arith.constant 0 : index
    %12 = arith.index_cast %11 : i32 to index
    %c1 = arith.constant 1 : index
    %c0_8 = arith.constant 0 : index
    %13 = vector.load %arg2[%c0_7, %12, %c1, %c0_8] : memref<1x10x10x16xbf16, #tpu.memory_space<vmem>>, vector<1x8x8x16xbf16>
    %14 = vector.shape_cast %13 : vector<1x8x8x16xbf16> to vector<8x8x16xbf16>
    %15 = vector.shape_cast %14 : vector<8x8x16xbf16> to vector<64x16xbf16>
    %c1_9 = arith.constant 1 : index
    %c0_10 = arith.constant 0 : index
    %c0_11 = arith.constant 0 : index
    %16 = vector.load %arg3[%c1_9, %c0_10, %c0_11] : memref<9x16x16xbf16, #tpu.memory_space<vmem>>, vector<1x16x16xbf16>
    %17 = vector.shape_cast %16 : vector<1x16x16xbf16> to vector<16x16xbf16>
    %cst_12 = arith.constant dense<0.000000e+00> : vector<64x16xf32>
    %18 = tpu.matmul %15, %17, %cst_12 {dimension_numbers = #tpu.dot_dimension_numbers<[1], [0], [0], [1], [0, 0, 1, 1], [], []>} : vector<64x16xbf16>, vector<16x16xbf16>, vector<64x16xf32> -> vector<64x16xf32>
    %19 = arith.addf %10, %18 : vector<64x16xf32>
    %c0_i32_13 = arith.constant 0 : i32
    %20 = arith.addi %0, %c0_i32_13 : i32
    %c0_14 = arith.constant 0 : index
    %21 = arith.index_cast %20 : i32 to index
    %c2 = arith.constant 2 : index
    %c0_15 = arith.constant 0 : index
    %22 = vector.load %arg2[%c0_14, %21, %c2, %c0_15] : memref<1x10x10x16xbf16, #tpu.memory_space<vmem>>, vector<1x8x8x16xbf16>
    %23 = vector.shape_cast %22 : vector<1x8x8x16xbf16> to vector<8x8x16xbf16>
    %24 = vector.shape_cast %23 : vector<8x8x16xbf16> to vector<64x16xbf16>
    %c2_16 = arith.constant 2 : index
    %c0_17 = arith.constant 0 : index
    %c0_18 = arith.constant 0 : index
    %25 = vector.load %arg3[%c2_16, %c0_17, %c0_18] : memref<9x16x16xbf16, #tpu.memory_space<vmem>>, vector<1x16x16xbf16>
    %26 = vector.shape_cast %25 : vector<1x16x16xbf16> to vector<16x16xbf16>
    %cst_19 = arith.constant dense<0.000000e+00> : vector<64x16xf32>
    %27 = tpu.matmul %24, %26, %cst_19 {dimension_numbers = #tpu.dot_dimension_numbers<[1], [0], [0], [1], [0, 0, 1, 1], [], []>} : vector<64x16xbf16>, vector<16x16xbf16>, vector<64x16xf32> -> vector<64x16xf32>
    %28 = arith.addf %19, %27 : vector<64x16xf32>
    %c1_i32 = arith.constant 1 : i32
    %29 = arith.addi %0, %c1_i32 : i32
    %c0_20 = arith.constant 0 : index
    %30 = arith.index_cast %29 : i32 to index
    %c0_21 = arith.constant 0 : index
    %c0_22 = arith.constant 0 : index
    %31 = vector.load %arg2[%c0_20, %30, %c0_21, %c0_22] : memref<1x10x10x16xbf16, #tpu.memory_space<vmem>>, vector<1x8x8x16xbf16>
    %32 = vector.shape_cast %31 : vector<1x8x8x16xbf16> to vector<8x8x16xbf16>
    %33 = vector.shape_cast %32 : vector<8x8x16xbf16> to vector<64x16xbf16>
    %c3 = arith.constant 3 : index
    %c0_23 = arith.constant 0 : index
    %c0_24 = arith.constant 0 : index
    %34 = vector.load %arg3[%c3, %c0_23, %c0_24] : memref<9x16x16xbf16, #tpu.memory_space<vmem>>, vector<1x16x16xbf16>
    %35 = vector.shape_cast %34 : vector<1x16x16xbf16> to vector<16x16xbf16>
    %cst_25 = arith.constant dense<0.000000e+00> : vector<64x16xf32>
    %36 = tpu.matmul %33, %35, %cst_25 {dimension_numbers = #tpu.dot_dimension_numbers<[1], [0], [0], [1], [0, 0, 1, 1], [], []>} : vector<64x16xbf16>, vector<16x16xbf16>, vector<64x16xf32> -> vector<64x16xf32>
    %37 = arith.addf %28, %36 : vector<64x16xf32>
    %c1_i32_26 = arith.constant 1 : i32
    %38 = arith.addi %0, %c1_i32_26 : i32
    %c0_27 = arith.constant 0 : index
    %39 = arith.index_cast %38 : i32 to index
    %c1_28 = arith.constant 1 : index
    %c0_29 = arith.constant 0 : index
    %40 = vector.load %arg2[%c0_27, %39, %c1_28, %c0_29] : memref<1x10x10x16xbf16, #tpu.memory_space<vmem>>, vector<1x8x8x16xbf16>
    %41 = vector.shape_cast %40 : vector<1x8x8x16xbf16> to vector<8x8x16xbf16>
    %42 = vector.shape_cast %41 : vector<8x8x16xbf16> to vector<64x16xbf16>
    %c4 = arith.constant 4 : index
    %c0_30 = arith.constant 0 : index
    %c0_31 = arith.constant 0 : index
    %43 = vector.load %arg3[%c4, %c0_30, %c0_31] : memref<9x16x16xbf16, #tpu.memory_space<vmem>>, vector<1x16x16xbf16>
    %44 = vector.shape_cast %43 : vector<1x16x16xbf16> to vector<16x16xbf16>
    %cst_32 = arith.constant dense<0.000000e+00> : vector<64x16xf32>
    %45 = tpu.matmul %42, %44, %cst_32 {dimension_numbers = #tpu.dot_dimension_numbers<[1], [0], [0], [1], [0, 0, 1, 1], [], []>} : vector<64x16xbf16>, vector<16x16xbf16>, vector<64x16xf32> -> vector<64x16xf32>
    %46 = arith.addf %37, %45 : vector<64x16xf32>
    %c1_i32_33 = arith.constant 1 : i32
    %47 = arith.addi %0, %c1_i32_33 : i32
    %c0_34 = arith.constant 0 : index
    %48 = arith.index_cast %47 : i32 to index
    %c2_35 = arith.constant 2 : index
    %c0_36 = arith.constant 0 : index
    %49 = vector.load %arg2[%c0_34, %48, %c2_35, %c0_36] : memref<1x10x10x16xbf16, #tpu.memory_space<vmem>>, vector<1x8x8x16xbf16>
    %50 = vector.shape_cast %49 : vector<1x8x8x16xbf16> to vector<8x8x16xbf16>
    %51 = vector.shape_cast %50 : vector<8x8x16xbf16> to vector<64x16xbf16>
    %c5 = arith.constant 5 : index
    %c0_37 = arith.constant 0 : index
    %c0_38 = arith.constant 0 : index
    %52 = vector.load %arg3[%c5, %c0_37, %c0_38] : memref<9x16x16xbf16, #tpu.memory_space<vmem>>, vector<1x16x16xbf16>
    %53 = vector.shape_cast %52 : vector<1x16x16xbf16> to vector<16x16xbf16>
    %cst_39 = arith.constant dense<0.000000e+00> : vector<64x16xf32>
    %54 = tpu.matmul %51, %53, %cst_39 {dimension_numbers = #tpu.dot_dimension_numbers<[1], [0], [0], [1], [0, 0, 1, 1], [], []>} : vector<64x16xbf16>, vector<16x16xbf16>, vector<64x16xf32> -> vector<64x16xf32>
    %55 = arith.addf %46, %54 : vector<64x16xf32>
    %c2_i32 = arith.constant 2 : i32
    %56 = arith.addi %0, %c2_i32 : i32
    %c0_40 = arith.constant 0 : index
    %57 = arith.index_cast %56 : i32 to index
    %c0_41 = arith.constant 0 : index
    %c0_42 = arith.constant 0 : index
    %58 = vector.load %arg2[%c0_40, %57, %c0_41, %c0_42] : memref<1x10x10x16xbf16, #tpu.memory_space<vmem>>, vector<1x8x8x16xbf16>
    %59 = vector.shape_cast %58 : vector<1x8x8x16xbf16> to vector<8x8x16xbf16>
    %60 = vector.shape_cast %59 : vector<8x8x16xbf16> to vector<64x16xbf16>
    %c6 = arith.constant 6 : index
    %c0_43 = arith.constant 0 : index
    %c0_44 = arith.constant 0 : index
    %61 = vector.load %arg3[%c6, %c0_43, %c0_44] : memref<9x16x16xbf16, #tpu.memory_space<vmem>>, vector<1x16x16xbf16>
    %62 = vector.shape_cast %61 : vector<1x16x16xbf16> to vector<16x16xbf16>
    %cst_45 = arith.constant dense<0.000000e+00> : vector<64x16xf32>
    %63 = tpu.matmul %60, %62, %cst_45 {dimension_numbers = #tpu.dot_dimension_numbers<[1], [0], [0], [1], [0, 0, 1, 1], [], []>} : vector<64x16xbf16>, vector<16x16xbf16>, vector<64x16xf32> -> vector<64x16xf32>
    %64 = arith.addf %55, %63 : vector<64x16xf32>
    %c2_i32_46 = arith.constant 2 : i32
    %65 = arith.addi %0, %c2_i32_46 : i32
    %c0_47 = arith.constant 0 : index
    %66 = arith.index_cast %65 : i32 to index
    %c1_48 = arith.constant 1 : index
    %c0_49 = arith.constant 0 : index
    %67 = vector.load %arg2[%c0_47, %66, %c1_48, %c0_49] : memref<1x10x10x16xbf16, #tpu.memory_space<vmem>>, vector<1x8x8x16xbf16>
    %68 = vector.shape_cast %67 : vector<1x8x8x16xbf16> to vector<8x8x16xbf16>
    %69 = vector.shape_cast %68 : vector<8x8x16xbf16> to vector<64x16xbf16>
    %c7 = arith.constant 7 : index
    %c0_50 = arith.constant 0 : index
    %c0_51 = arith.constant 0 : index
    %70 = vector.load %arg3[%c7, %c0_50, %c0_51] : memref<9x16x16xbf16, #tpu.memory_space<vmem>>, vector<1x16x16xbf16>
    %71 = vector.shape_cast %70 : vector<1x16x16xbf16> to vector<16x16xbf16>
    %cst_52 = arith.constant dense<0.000000e+00> : vector<64x16xf32>
    %72 = tpu.matmul %69, %71, %cst_52 {dimension_numbers = #tpu.dot_dimension_numbers<[1], [0], [0], [1], [0, 0, 1, 1], [], []>} : vector<64x16xbf16>, vector<16x16xbf16>, vector<64x16xf32> -> vector<64x16xf32>
    %73 = arith.addf %64, %72 : vector<64x16xf32>
    %c2_i32_53 = arith.constant 2 : i32
    %74 = arith.addi %0, %c2_i32_53 : i32
    %c0_54 = arith.constant 0 : index
    %75 = arith.index_cast %74 : i32 to index
    %c2_55 = arith.constant 2 : index
    %c0_56 = arith.constant 0 : index
    %76 = vector.load %arg2[%c0_54, %75, %c2_55, %c0_56] : memref<1x10x10x16xbf16, #tpu.memory_space<vmem>>, vector<1x8x8x16xbf16>
    %77 = vector.shape_cast %76 : vector<1x8x8x16xbf16> to vector<8x8x16xbf16>
    %78 = vector.shape_cast %77 : vector<8x8x16xbf16> to vector<64x16xbf16>
    %c8 = arith.constant 8 : index
    %c0_57 = arith.constant 0 : index
    %c0_58 = arith.constant 0 : index
    %79 = vector.load %arg3[%c8, %c0_57, %c0_58] : memref<9x16x16xbf16, #tpu.memory_space<vmem>>, vector<1x16x16xbf16>
    %80 = vector.shape_cast %79 : vector<1x16x16xbf16> to vector<16x16xbf16>
    %cst_59 = arith.constant dense<0.000000e+00> : vector<64x16xf32>
    %81 = tpu.matmul %78, %80, %cst_59 {dimension_numbers = #tpu.dot_dimension_numbers<[1], [0], [0], [1], [0, 0, 1, 1], [], []>} : vector<64x16xbf16>, vector<16x16xbf16>, vector<64x16xf32> -> vector<64x16xf32>
    %82 = arith.addf %73, %81 : vector<64x16xf32>
    %c0_60 = arith.constant 0 : index
    %c0_61 = arith.constant 0 : index
    %83 = vector.load %arg4[%c0_60, %c0_61] : memref<1x16xf32, #tpu.memory_space<vmem>>, vector<1x16xf32>
    %84 = vector.broadcast %83 : vector<1x16xf32> to vector<64x16xf32>
    %85 = arith.addf %82, %84 : vector<64x16xf32>
    %cst_62 = arith.constant 0.000000e+00 : f32
    %86 = vector.broadcast %cst_62 : f32 to vector<64x16xf32>
    %87 = arith.maximumf %85, %86 : vector<64x16xf32>
    %88 = vector.shape_cast %87 : vector<64x16xf32> to vector<8x8x16xf32>
    %89 = arith.truncf %88 : vector<8x8x16xf32> to vector<8x8x16xbf16>
    %c0_63 = arith.constant 0 : index
    %c0_64 = arith.constant 0 : index
    %c0_65 = arith.constant 0 : index
    %c0_66 = arith.constant 0 : index
    %90 = vector.load %arg5[%c0_63, %c0_64, %c0_65, %c0_66] : memref<1x8x8x16xbf16, #tpu.memory_space<vmem>>, vector<1x8x8x16xbf16>
    %91 = vector.shape_cast %90 : vector<1x8x8x16xbf16> to vector<8x8x16xbf16>
    %92 = vector.shape_cast %89 : vector<8x8x16xbf16> to vector<1x8x8x16xbf16>
    tpu.vector_store %arg5[%c0_63, %c0_64, %c0_65, %c0_66], %92 {strides = array<i32>} : memref<1x8x8x16xbf16, #tpu.memory_space<vmem>>, vector<1x8x8x16xbf16>,
    return
  }
  func.func @transform_0(%arg0: i32, %arg1: i32) -> (i32, i32, i32, i32) {
    %c0_i32 = arith.constant 0 : i32
    %c0_i32_0 = arith.constant 0 : i32
    %c0_i32_1 = arith.constant 0 : i32
    %c0_i32_2 = arith.constant 0 : i32
    return %arg0, %c0_i32, %c0_i32_0, %c0_i32_1 : i32, i32, i32, i32
  }
  func.func @transform_1(%arg0: i32, %arg1: i32) -> (i32, i32, i32) {
    %c0_i32 = arith.constant 0 : i32
    %c0_i32_0 = arith.constant 0 : i32
    %c0_i32_1 = arith.constant 0 : i32
    %c0_i32_2 = arith.constant 0 : i32
    return %c0_i32, %c0_i32_0, %c0_i32_1 : i32, i32, i32
  }
  func.func @transform_2(%arg0: i32, %arg1: i32) -> (i32, i32) {
    %c0_i32 = arith.constant 0 : i32
    %c0_i32_0 = arith.constant 0 : i32
    %c0_i32_1 = arith.constant 0 : i32
    return %c0_i32, %c0_i32_0 : i32, i32
  }
  func.func @transform_3(%arg0: i32, %arg1: i32) -> (i32, i32, i32, i32) {
    %c0_i32 = arith.constant 0 : i32
    %c0_i32_0 = arith.constant 0 : i32
    %c0_i32_1 = arith.constant 0 : i32
    return %arg0, %arg1, %c0_i32, %c0_i32_0 : i32, i32, i32, i32
  }
}

</mosaic_0001>

<llo_original>
// kernel: bottleneck_forward_pallas.3
$region0: #{bottleneck_forward_pallas.3}
  #allocation0 [shape = 'u32[]', space=smem, size = 0x4, offset = 0x4, fixed_abs, tag = 'smem constant byte address 0x4 - core index']
  #allocation1 [shape = 'u32[72,128]{1,0:T(1,128)}', space=vmem, size = 0x9000, scoped, tag = 'internal scratch']
  %s0 = inlined_call_operand.vmem [shape: bf16[128,32], index: 0, kind: input, shape index: {}]
  %s1 = inlined_call_operand.vmem [shape: bf16[32,16], index: 1, kind: input, shape index: {}]
  %s2 = inlined_call_operand.vmem [shape: f32[1,16], index: 2, kind: input, shape index: {}]
  %s3 = inlined_call_operand.vmem [shape: bf16[128,16], index: 3, kind: output, shape index: {}]
  %s4 = sld [smem:[#allocation0]]
  $region22: #{bottleneck_forward_pallas.3} parent=0
    _
  %s6 = ssub.s32 1, %s4
  %s7 = scalar_select 0, %s6, %s4
  // Predicated region
  $region2: #{bottleneck_forward_pallas.3} parent=0 // pred_check
    _
  $region3: #{bottleneck_forward_pallas.3} parent=0 // pred_check_branch
    %9 = sbr.rel (0) target = $region5
  $region4: #{bottleneck_forward_pallas.3} parent=0 // pred_region
    _
  $region5: #{bottleneck_forward_pallas.3} parent=0 // pred_fallthru
    _
  // Predicated region
  $region6: #{bottleneck_forward_pallas.3} parent=0 // pred_check
    _
  $region7: #{bottleneck_forward_pallas.3} parent=0 // pred_check_branch
    %11 = sbr.rel (0) target = $region9
  $region8: #{bottleneck_forward_pallas.3} parent=0 // pred_region
    _
  $region9: #{bottleneck_forward_pallas.3} parent=0 // pred_fallthru
    _
  // Predicated region
  $region10: #{bottleneck_forward_pallas.3} parent=0 // pred_check
    _
  $region11: #{bottleneck_forward_pallas.3} parent=0 // pred_check_branch
    %13 = sbr.rel (0) target = $region13
  $region12: #{bottleneck_forward_pallas.3} parent=0 // pred_region
    _
  $region13: #{bottleneck_forward_pallas.3} parent=0 // pred_fallthru
    _
  %v15 = vld [vmem:[%s0] sm:$0xf]
  %v16 = vld [vmem:[%s0 + $0x4] sm:$0xf]
  %v17 = vld [vmem:[%s0 + $0x8] sm:$0xf]
  %v18 = vld [vmem:[%s0 + $0xc] sm:$0xf]
  %v19 = vld [vmem:[%s0 + $0x10] sm:$0xf]
  %v20 = vld [vmem:[%s0 + $0x14] sm:$0xf]
  %v21 = vld [vmem:[%s0 + $0x18] sm:$0xf]
  %v22 = vld [vmem:[%s0 + $0x1c] sm:$0xf]
  %v23 = vld [vmem:[%s0 + $0x20] sm:$0xf]
  %v24 = vld [vmem:[%s0 + $0x24] sm:$0xf]
  %v25 = vld [vmem:[%s0 + $0x28] sm:$0xf]
  %v26 = vld [vmem:[%s0 + $0x2c] sm:$0xf]
  %v27 = vld [vmem:[%s0 + $0x30] sm:$0xf]
  %v28 = vld [vmem:[%s0 + $0x34] sm:$0xf]
  %v29 = vld [vmem:[%s0 + $0x38] sm:$0xf]
  %v30 = vld [vmem:[%s0 + $0x3c] sm:$0xf]
  %v31 = vld [vmem:[%s1] sm:$0xf]
  %v32 = vld [vmem:[%s1 + $0x4] sm:$0xf]
  %v33 = vld [vmem:[%s1 + $0x8] sm:$0xf]
  %v34 = vld [vmem:[%s1 + $0xc] sm:$0xf]
  %v35 = vld [vmem:[%s2] sm:$0x1]
  %v37 = vperm.slane %v35, 0
  %v55 = vunpack.c.l.b16 %v15
  %v56 = vunpack.c.l.b16 %v16
  %v57 = vunpack.c.l.b16 %v17
  %v58 = vunpack.c.l.b16 %v18
  %v59 = vunpack.c.l.b16 %v19
  %v60 = vunpack.c.l.b16 %v20
  %v61 = vunpack.c.l.b16 %v21
  %v62 = vunpack.c.l.b16 %v22
  %v63 = vunpack.c.l.b16 %v23
  %v64 = vunpack.c.l.b16 %v24
  %v65 = vunpack.c.l.b16 %v25
  %v66 = vunpack.c.l.b16 %v26
  %v67 = vunpack.c.l.b16 %v27
  %v68 = vunpack.c.l.b16 %v28
  %v69 = vunpack.c.l.b16 %v29
  %v70 = vunpack.c.l.b16 %v30
  %v71 = vpack.c.b16 %v56, %v55
  %v72 = vpack.c.b16 %v58, %v57
  %v73 = vpack.c.b16 %v60, %v59
  %v74 = vpack.c.b16 %v62, %v61
  %v75 = vpack.c.b16 %v64, %v63
  %v76 = vpack.c.b16 %v66, %v65
  %v77 = vpack.c.b16 %v68, %v67
  %v78 = vpack.c.b16 %v70, %v69
  %v83 = vunpack.c.l.b16 %v31
  %v84 = vunpack.c.l.b16 %v32
  %v85 = vunpack.c.l.b16 %v33
  %v86 = vunpack.c.l.b16 %v34
  %v87 = vpack.c.b16 %v84, %v83
  %v88 = vpack.c.b16 %v86, %v85
  %vm91 = vcmask 261120
  %v93 = vsel %vm91, %v71, 0
  %v96 = vsel %vm91, %v72, 0
  %v99 = vsel %vm91, %v73, 0
  %v102 = vsel %vm91, %v74, 0
  %v105 = vsel %vm91, %v75, 0
  %v108 = vsel %vm91, %v76, 0
  %v111 = vsel %vm91, %v77, 0
  %v114 = vsel %vm91, %v78, 0
  %116 = vmatpush.bf16.msra.mxu0 0
  %117 = vmatpush.bf16.msra.mxu0 0
  %118 = vmatpush.bf16.msra.mxu0 0
  %119 = vmatpush.bf16.msra.mxu0 0
  %120 = vmatpush.bf16.msra.mxu0 0
  %121 = vmatpush.bf16.msra.mxu0 0
  %122 = vmatpush.bf16.msra.mxu0 %v88
  %123 = vmatpush.bf16.msra.mxu0 %v87
  %124 = vmatmul.bf16.gmra.mxu0 %v93
  %v125 = vpop.f32.mrf.mxu0
  %v126 = vadd.f32 %v37, %v125
  %v127 = vpop.f32.mrf.mxu0
  %v128 = vadd.f32 %v37, %v127
  %129 = vmatmul.bf16.gmra.mxu0 %v96
  %v130 = vpop.f32.mrf.mxu0
  %v131 = vadd.f32 %v37, %v130
  %v132 = vpop.f32.mrf.mxu0
  %v133 = vadd.f32 %v37, %v132
  %134 = vmatmul.bf16.gmra.mxu0 %v99
  %v135 = vpop.f32.mrf.mxu0
  %v136 = vadd.f32 %v37, %v135
  %v137 = vpop.f32.mrf.mxu0
  %v138 = vadd.f32 %v37, %v137
  %139 = vmatmul.bf16.gmra.mxu0 %v102
  %v140 = vpop.f32.mrf.mxu0
  %v141 = vadd.f32 %v37, %v140
  %v142 = vpop.f32.mrf.mxu0
  %v143 = vadd.f32 %v37, %v142
  %144 = vmatmul.bf16.gmra.mxu0 %v105
  %v145 = vpop.f32.mrf.mxu0
  %v146 = vadd.f32 %v37, %v145
  %v147 = vpop.f32.mrf.mxu0
  %v148 = vadd.f32 %v37, %v147
  %149 = vmatmul.bf16.gmra.mxu0 %v108
  %v150 = vpop.f32.mrf.mxu0
  %v151 = vadd.f32 %v37, %v150
  %v152 = vpop.f32.mrf.mxu0
  %v153 = vadd.f32 %v37, %v152
  %154 = vmatmul.bf16.gmra.mxu0 %v111
  %v155 = vpop.f32.mrf.mxu0
  %v156 = vadd.f32 %v37, %v155
  %v157 = vpop.f32.mrf.mxu0
  %v158 = vadd.f32 %v37, %v157
  %159 = vmatmul.bf16.gmra.mxu0 %v114
  %v160 = vpop.f32.mrf.mxu0
  %v161 = vadd.f32 %v37, %v160
  %v162 = vpop.f32.mrf.mxu0
  %v163 = vadd.f32 %v37, %v162
  %164 = vdwg.mxu0
  %v165 = vmax.f32 %v126, 0.0
  %v166 = vmax.f32 %v128, 0.0
  %v167 = vmax.f32 %v131, 0.0
  %v168 = vmax.f32 %v133, 0.0
  %v169 = vmax.f32 %v136, 0.0
  %v170 = vmax.f32 %v138, 0.0
  %v171 = vmax.f32 %v141, 0.0
  %v172 = vmax.f32 %v143, 0.0
  %v173 = vmax.f32 %v146, 0.0
  %v174 = vmax.f32 %v148, 0.0
  %v175 = vmax.f32 %v151, 0.0
  %v176 = vmax.f32 %v153, 0.0
  %v177 = vmax.f32 %v156, 0.0
  %v178 = vmax.f32 %v158, 0.0
  %v179 = vmax.f32 %v161, 0.0
  %v180 = vmax.f32 %v163, 0.0
  %v181 = vpack.c.bf16 %v165, %v165
  %v182 = vpack.c.bf16 %v166, %v166
  %v183 = vpack.c.bf16 %v167, %v167
  %v184 = vpack.c.bf16 %v168, %v168
  %v185 = vpack.c.bf16 %v169, %v169
  %v186 = vpack.c.bf16 %v170, %v170
  %v187 = vpack.c.bf16 %v171, %v171
  %v188 = vpack.c.bf16 %v172, %v172
  %v189 = vpack.c.bf16 %v173, %v173
  %v190 = vpack.c.bf16 %v174, %v174
  %v191 = vpack.c.bf16 %v175, %v175
  %v192 = vpack.c.bf16 %v176, %v176
  %v193 = vpack.c.bf16 %v177, %v177
  %v194 = vpack.c.bf16 %v178, %v178
  %v195 = vpack.c.bf16 %v179, %v179
  %v196 = vpack.c.bf16 %v180, %v180
  %vm197 = vcmask 125952
  %198 = vst.msk [vmem:[%s3] sm:$0xf] %vm197, %v181
  %199 = vst.msk [vmem:[%s3 + $0x4] sm:$0xf] %vm197, %v182
  %200 = vst.msk [vmem:[%s3 + $0x8] sm:$0xf] %vm197, %v183
  %201 = vst.msk [vmem:[%s3 + $0xc] sm:$0xf] %vm197, %v184
  %202 = vst.msk [vmem:[%s3 + $0x10] sm:$0xf] %vm197, %v185
  %203 = vst.msk [vmem:[%s3 + $0x14] sm:$0xf] %vm197, %v186
  %204 = vst.msk [vmem:[%s3 + $0x18] sm:$0xf] %vm197, %v187
  %205 = vst.msk [vmem:[%s3 + $0x1c] sm:$0xf] %vm197, %v188
  %206 = vst.msk [vmem:[%s3 + $0x20] sm:$0xf] %vm197, %v189
  %207 = vst.msk [vmem:[%s3 + $0x24] sm:$0xf] %vm197, %v190
  %208 = vst.msk [vmem:[%s3 + $0x28] sm:$0xf] %vm197, %v191
  %209 = vst.msk [vmem:[%s3 + $0x2c] sm:$0xf] %vm197, %v192
  %210 = vst.msk [vmem:[%s3 + $0x30] sm:$0xf] %vm197, %v193
  %211 = vst.msk [vmem:[%s3 + $0x34] sm:$0xf] %vm197, %v194
  %212 = vst.msk [vmem:[%s3 + $0x38] sm:$0xf] %vm197, %v195
  %213 = vst.msk [vmem:[%s3 + $0x3c] sm:$0xf] %vm197, %v196
  // Predicated region
  $region14: #{bottleneck_forward_pallas.3} parent=0 // pred_check
    _
  $region15: #{bottleneck_forward_pallas.3} parent=0 // pred_check_branch
    %215 = sbr.rel (0) target = $region17
  $region16: #{bottleneck_forward_pallas.3} parent=0 // pred_region
    _
  $region17: #{bottleneck_forward_pallas.3} parent=0 // pred_fallthru
    _
  // Predicated region
  $region18: #{bottleneck_forward_pallas.3} parent=0 // pred_check
    _
  $region19: #{bottleneck_forward_pallas.3} parent=0 // pred_check_branch
    %217 = sbr.rel (0) target = $region21
  $region20: #{bottleneck_forward_pallas.3} parent=0 // pred_region
    _
  $region21: #{bottleneck_forward_pallas.3} parent=0 // pred_fallthru
    _

// kernel: bottleneck_forward_pallas.5
$region0: #{bottleneck_forward_pallas.5}
  #allocation0 [shape = 'u32[]', space=smem, size = 0x4, offset = 0x4, fixed_abs, tag = 'smem constant byte address 0x4 - core index']
  #allocation1 [shape = 'u32[72,128]{1,0:T(1,128)}', space=vmem, size = 0x9000, scoped, tag = 'internal scratch']
  %s0 = inlined_call_operand.vmem [shape: bf16[128,16], index: 0, kind: input, shape index: {}]
  %s1 = inlined_call_operand.vmem [shape: bf16[16,64], index: 1, kind: input, shape index: {}]
  %s2 = inlined_call_operand.vmem [shape: bf16[128,32], index: 2, kind: input, shape index: {}]
  %s3 = inlined_call_operand.vmem [shape: bf16[32,64], index: 3, kind: input, shape index: {}]
  %s4 = inlined_call_operand.vmem [shape: f32[1,64], index: 4, kind: input, shape index: {}]
  %s5 = inlined_call_operand.hbm [shape: f32[128,64], index: 5, kind: output, shape index: {}]
  %s6 = sld [smem:[#allocation0]]
  $region30: #{bottleneck_forward_pallas.5} parent=0
    _
  %s8 = ssub.s32 1, %s6
  %s9 = scalar_select 0, %s8, %s6
  $region1: #{bottleneck_forward_pallas.5} parent=0
    #allocation2 [shape = 'u8[65536]{0}', space=vmem, size = 0x10000, scoped, tag = 'output window, operand 0, single buffered']
    #allocation3 [shape = 's32[1]{0}', space=sflag, size = 0x4, scoped, tag = 'scoped memory for bottleneck_forward_pallas.5']
    %10 = vsyncpa [#allocation3], 0
    // Predicated region
    $region2: #{bottleneck_forward_pallas.5} parent=1 // pred_check
      _
    $region3: #{bottleneck_forward_pallas.5} parent=1 // pred_check_branch
      %12 = sbr.rel (0) target = $region5
    $region4: #{bottleneck_forward_pallas.5} parent=1 // pred_region
      _
    $region5: #{bottleneck_forward_pallas.5} parent=1 // pred_fallthru
      _
    // Predicated region
    $region6: #{bottleneck_forward_pallas.5} parent=1 // pred_check
      _
    $region7: #{bottleneck_forward_pallas.5} parent=1 // pred_check_branch
      %14 = sbr.rel (0) target = $region9
    $region8: #{bottleneck_forward_pallas.5} parent=1 // pred_region
      _
    $region9: #{bottleneck_forward_pallas.5} parent=1 // pred_fallthru
      _
    // Predicated region
    $region10: #{bottleneck_forward_pallas.5} parent=1 // pred_check
      _
    $region11: #{bottleneck_forward_pallas.5} parent=1 // pred_check_branch
      %16 = sbr.rel (0) target = $region13
    $region12: #{bottleneck_forward_pallas.5} parent=1 // pred_region
      _
    $region13: #{bottleneck_forward_pallas.5} parent=1 // pred_fallthru
      _
    // Predicated region
    $region14: #{bottleneck_forward_pallas.5} parent=1 // pred_check
      _
    $region15: #{bottleneck_forward_pallas.5} parent=1 // pred_check_branch
      %18 = sbr.rel (0) target = $region17
    $region16: #{bottleneck_forward_pallas.5} parent=1 // pred_region
      _
    $region17: #{bottleneck_forward_pallas.5} parent=1 // pred_fallthru
      _
    // Predicated region
    $region18: #{bottleneck_forward_pallas.5} parent=1 // pred_check
      _
    $region19: #{bottleneck_forward_pallas.5} parent=1 // pred_check_branch
      %20 = sbr.rel (0) target = $region21
    $region20: #{bottleneck_forward_pallas.5} parent=1 // pred_region
      _
    $region21: #{bottleneck_forward_pallas.5} parent=1 // pred_fallthru
      _
    %v22 = vld [vmem:[%s0] sm:$0xf]
    %v23 = vld [vmem:[%s0 + $0x4] sm:$0xf]
    %v24 = vld [vmem:[%s0 + $0x8] sm:$0xf]
    %v25 = vld [vmem:[%s0 + $0xc] sm:$0xf]
    %v26 = vld [vmem:[%s0 + $0x10] sm:$0xf]
    %v27 = vld [vmem:[%s0 + $0x14] sm:$0xf]
    %v28 = vld [vmem:[%s0 + $0x18] sm:$0xf]
    %v29 = vld [vmem:[%s0 + $0x1c] sm:$0xf]
    %v30 = vld [vmem:[%s0 + $0x20] sm:$0xf]
    %v31 = vld [vmem:[%s0 + $0x24] sm:$0xf]
    %v32 = vld [vmem:[%s0 + $0x28] sm:$0xf]
    %v33 = vld [vmem:[%s0 + $0x2c] sm:$0xf]
    %v34 = vld [vmem:[%s0 + $0x30] sm:$0xf]
    %v35 = vld [vmem:[%s0 + $0x34] sm:$0xf]
    %v36 = vld [vmem:[%s0 + $0x38] sm:$0xf]
    %v37 = vld [vmem:[%s0 + $0x3c] sm:$0xf]
    %v38 = vld [vmem:[%s1] sm:$0xf]
    %v39 = vld [vmem:[%s1 + $0x4] sm:$0xf]
    %v40 = vld [vmem:[%s2] sm:$0xf]
    %v41 = vld [vmem:[%s2 + $0x4] sm:$0xf]
    %v42 = vld [vmem:[%s2 + $0x8] sm:$0xf]
    %v43 = vld [vmem:[%s2 + $0xc] sm:$0xf]
    %v44 = vld [vmem:[%s2 + $0x10] sm:$0xf]
    %v45 = vld [vmem:[%s2 + $0x14] sm:$0xf]
    %v46 = vld [vmem:[%s2 + $0x18] sm:$0xf]
    %v47 = vld [vmem:[%s2 + $0x1c] sm:$0xf]
    %v48 = vld [vmem:[%s2 + $0x20] sm:$0xf]
    %v49 = vld [vmem:[%s2 + $0x24] sm:$0xf]
    %v50 = vld [vmem:[%s2 + $0x28] sm:$0xf]
    %v51 = vld [vmem:[%s2 + $0x2c] sm:$0xf]
    %v52 = vld [vmem:[%s2 + $0x30] sm:$0xf]
    %v53 = vld [vmem:[%s2 + $0x34] sm:$0xf]
    %v54 = vld [vmem:[%s2 + $0x38] sm:$0xf]
    %v55 = vld [vmem:[%s2 + $0x3c] sm:$0xf]
    %v56 = vld [vmem:[%s3] sm:$0xf]
    %v57 = vld [vmem:[%s3 + $0x4] sm:$0xf]
    %v58 = vld [vmem:[%s3 + $0x8] sm:$0xf]
    %v59 = vld [vmem:[%s3 + $0xc] sm:$0xf]
    %v76 = vunpack.c.l.b16 %v40
    %v77 = vunpack.c.l.b16 %v41
    %v78 = vunpack.c.l.b16 %v42
    %v79 = vunpack.c.l.b16 %v43
    %v80 = vunpack.c.l.b16 %v44
    %v81 = vunpack.c.l.b16 %v45
    %v82 = vunpack.c.l.b16 %v46
    %v83 = vunpack.c.l.b16 %v47
    %v84 = vunpack.c.l.b16 %v48
    %v85 = vunpack.c.l.b16 %v49
    %v86 = vunpack.c.l.b16 %v50
    %v87 = vunpack.c.l.b16 %v51
    %v88 = vunpack.c.l.b16 %v52
    %v89 = vunpack.c.l.b16 %v53
    %v90 = vunpack.c.l.b16 %v54
    %v91 = vunpack.c.l.b16 %v55
    %v92 = vpack.c.b16 %v77, %v76
    %v93 = vpack.c.b16 %v79, %v78
    %v94 = vpack.c.b16 %v81, %v80
    %v95 = vpack.c.b16 %v83, %v82
    %v96 = vpack.c.b16 %v85, %v84
    %v97 = vpack.c.b16 %v87, %v86
    %v98 = vpack.c.b16 %v89, %v88
    %v99 = vpack.c.b16 %v91, %v90
    %v104 = vunpack.c.l.b16 %v56
    %v105 = vunpack.c.l.b16 %v57
    %v106 = vunpack.c.l.b16 %v58
    %v107 = vunpack.c.l.b16 %v59
    %v108 = vpack.c.b16 %v105, %v104
    %v109 = vpack.c.b16 %v107, %v106
    %vm112 = vcmask 261120
    %v114 = vsel %vm112, %v92, 0
    %v117 = vsel %vm112, %v93, 0
    %v120 = vsel %vm112, %v94, 0
    %v123 = vsel %vm112, %v95, 0
    %v126 = vsel %vm112, %v96, 0
    %v129 = vsel %vm112, %v97, 0
    %v132 = vsel %vm112, %v98, 0
    %v135 = vsel %vm112, %v99, 0
    %137 = vmatpush.bf16.msra.mxu0 0
    %138 = vmatpush.bf16.msra.mxu0 0
    %139 = vmatpush.bf16.msra.mxu0 0
    %140 = vmatpush.bf16.msra.mxu0 0
    %141 = vmatpush.bf16.msra.mxu0 0
    %142 = vmatpush.bf16.msra.mxu0 0
    %143 = vmatpush.bf16.msra.mxu0 %v109
    %144 = vmatpush.bf16.msra.mxu0 %v108
    %145 = vmatmul.bf16.gmra.mxu0 %v114
    %v146 = vpop.f32.mrf.mxu0
    %v147 = vadd.f32 0.0, %v146
    %v148 = vpop.f32.mrf.mxu0
    %v149 = vadd.f32 0.0, %v148
    %150 = vmatmul.bf16.gmra.mxu0 %v117
    %v151 = vpop.f32.mrf.mxu0
    %v152 = vadd.f32 0.0, %v151
    %v153 = vpop.f32.mrf.mxu0
    %v154 = vadd.f32 0.0, %v153
    %155 = vmatmul.bf16.gmra.mxu0 %v120
    %v156 = vpop.f32.mrf.mxu0
    %v157 = vadd.f32 0.0, %v156
    %v158 = vpop.f32.mrf.mxu0
    %v159 = vadd.f32 0.0, %v158
    %160 = vmatmul.bf16.gmra.mxu0 %v123
    %v161 = vpop.f32.mrf.mxu0
    %v162 = vadd.f32 0.0, %v161
    %v163 = vpop.f32.mrf.mxu0
    %v164 = vadd.f32 0.0, %v163
    %165 = vmatmul.bf16.gmra.mxu0 %v126
    %v166 = vpop.f32.mrf.mxu0
    %v167 = vadd.f32 0.0, %v166
    %v168 = vpop.f32.mrf.mxu0
    %v169 = vadd.f32 0.0, %v168
    %170 = vmatmul.bf16.gmra.mxu0 %v129
    %v171 = vpop.f32.mrf.mxu0
    %v172 = vadd.f32 0.0, %v171
    %v173 = vpop.f32.mrf.mxu0
    %v174 = vadd.f32 0.0, %v173
    %175 = vmatmul.bf16.gmra.mxu0 %v132
    %v176 = vpop.f32.mrf.mxu0
    %v177 = vadd.f32 0.0, %v176
    %v178 = vpop.f32.mrf.mxu0
    %v179 = vadd.f32 0.0, %v178
    %180 = vmatmul.bf16.gmra.mxu0 %v135
    %v181 = vpop.f32.mrf.mxu0
    %v182 = vadd.f32 0.0, %v181
    %v183 = vpop.f32.mrf.mxu0
    %v184 = vadd.f32 0.0, %v183
    %185 = vdwg.mxu0
    %v202 = vunpack.c.l.b16 %v22
    %v203 = vunpack.c.l.b16 %v23
    %v204 = vunpack.c.l.b16 %v24
    %v205 = vunpack.c.l.b16 %v25
    %v206 = vunpack.c.l.b16 %v26
    %v207 = vunpack.c.l.b16 %v27
    %v208 = vunpack.c.l.b16 %v28
    %v209 = vunpack.c.l.b16 %v29
    %v210 = vunpack.c.l.b16 %v30
    %v211 = vunpack.c.l.b16 %v31
    %v212 = vunpack.c.l.b16 %v32
    %v213 = vunpack.c.l.b16 %v33
    %v214 = vunpack.c.l.b16 %v34
    %v215 = vunpack.c.l.b16 %v35
    %v216 = vunpack.c.l.b16 %v36
    %v217 = vunpack.c.l.b16 %v37
    %v218 = vpack.c.b16 %v203, %v202
    %v219 = vpack.c.b16 %v205, %v204
    %v220 = vpack.c.b16 %v207, %v206
    %v221 = vpack.c.b16 %v209, %v208
    %v222 = vpack.c.b16 %v211, %v210
    %v223 = vpack.c.b16 %v213, %v212
    %v224 = vpack.c.b16 %v215, %v214
    %v225 = vpack.c.b16 %v217, %v216
    %v228 = vunpack.c.l.b16 %v38
    %v229 = vunpack.c.l.b16 %v39
    %v230 = vpack.c.b16 %v229, %v228
    %vm232 = vcmask 130048
    %v234 = vsel %vm232, %v218, 0
    %v237 = vsel %vm232, %v219, 0
    %v240 = vsel %vm232, %v220, 0
    %v243 = vsel %vm232, %v221, 0
    %v246 = vsel %vm232, %v222, 0
    %v249 = vsel %vm232, %v223, 0
    %v252 = vsel %vm232, %v224, 0
    %v255 = vsel %vm232, %v225, 0
    %257 = vmatpush.bf16.msra.mxu0 0
    %258 = vmatpush.bf16.msra.mxu0 0
    %259 = vmatpush.bf16.msra.mxu0 0
    %260 = vmatpush.bf16.msra.mxu0 0
    %261 = vmatpush.bf16.msra.mxu0 0
    %262 = vmatpush.bf16.msra.mxu0 0
    %263 = vmatpush.bf16.msra.mxu0 0
    %264 = vmatpush.bf16.msra.mxu0 %v230
    %265 = vmatmul.bf16.gmra.mxu0 %v234
    %v266 = vpop.f32.mrf.mxu0
    %v267 = vadd.f32 %v147, %v266
    %v268 = vpop.f32.mrf.mxu0
    %v269 = vadd.f32 %v149, %v268
    %270 = vmatmul.bf16.gmra.mxu0 %v237
    %v271 = vpop.f32.mrf.mxu0
    %v272 = vadd.f32 %v152, %v271
    %v273 = vpop.f32.mrf.mxu0
    %v274 = vadd.f32 %v154, %v273
    %275 = vmatmul.bf16.gmra.mxu0 %v240
    %v276 = vpop.f32.mrf.mxu0
    %v277 = vadd.f32 %v157, %v276
    %v278 = vpop.f32.mrf.mxu0
    %v279 = vadd.f32 %v159, %v278
    %280 = vmatmul.bf16.gmra.mxu0 %v243
    %v281 = vpop.f32.mrf.mxu0
    %v282 = vadd.f32 %v162, %v281
    %v283 = vpop.f32.mrf.mxu0
    %v284 = vadd.f32 %v164, %v283
    %285 = vmatmul.bf16.gmra.mxu0 %v246
    %v286 = vpop.f32.mrf.mxu0
    %v287 = vadd.f32 %v167, %v286
    %v288 = vpop.f32.mrf.mxu0
    %v289 = vadd.f32 %v169, %v288
    %290 = vmatmul.bf16.gmra.mxu0 %v249
    %v291 = vpop.f32.mrf.mxu0
    %v292 = vadd.f32 %v172, %v291
    %v293 = vpop.f32.mrf.mxu0
    %v294 = vadd.f32 %v174, %v293
    %295 = vmatmul.bf16.gmra.mxu0 %v252
    %v296 = vpop.f32.mrf.mxu0
    %v297 = vadd.f32 %v177, %v296
    %v298 = vpop.f32.mrf.mxu0
    %v299 = vadd.f32 %v179, %v298
    %300 = vmatmul.bf16.gmra.mxu0 %v255
    %v301 = vpop.f32.mrf.mxu0
    %v302 = vadd.f32 %v182, %v301
    %v303 = vpop.f32.mrf.mxu0
    %v304 = vadd.f32 %v184, %v303
    %305 = vdwg.mxu0
    %v306 = vld [vmem:[%s4] sm:$0x1]
    %v308 = vperm.slane %v306, 0
    %v310 = vadd.f32 %v267, %v308
    %v311 = vadd.f32 %v269, %v308
    %v312 = vadd.f32 %v272, %v308
    %v313 = vadd.f32 %v274, %v308
    %v314 = vadd.f32 %v277, %v308
    %v315 = vadd.f32 %v279, %v308
    %v316 = vadd.f32 %v282, %v308
    %v317 = vadd.f32 %v284, %v308
    %v318 = vadd.f32 %v287, %v308
    %v319 = vadd.f32 %v289, %v308
    %v320 = vadd.f32 %v292, %v308
    %v321 = vadd.f32 %v294, %v308
    %v322 = vadd.f32 %v297, %v308
    %v323 = vadd.f32 %v299, %v308
    %v324 = vadd.f32 %v302, %v308
    %v325 = vadd.f32 %v304, %v308
    %v326 = vmax.f32 %v310, 0.0
    %v327 = vmax.f32 %v311, 0.0
    %v328 = vmax.f32 %v312, 0.0
    %v329 = vmax.f32 %v313, 0.0
    %v330 = vmax.f32 %v314, 0.0
    %v331 = vmax.f32 %v315, 0.0
    %v332 = vmax.f32 %v316, 0.0
    %v333 = vmax.f32 %v317, 0.0
    %v334 = vmax.f32 %v318, 0.0
    %v335 = vmax.f32 %v319, 0.0
    %v336 = vmax.f32 %v320, 0.0
    %v337 = vmax.f32 %v321, 0.0
    %v338 = vmax.f32 %v322, 0.0
    %v339 = vmax.f32 %v323, 0.0
    %v340 = vmax.f32 %v324, 0.0
    %v341 = vmax.f32 %v325, 0.0
    %vm342 = vcmask 523264
    %343 = vst.msk [vmem:[#allocation2] sm:$0xff] %vm342, %v326
    %344 = vst.msk [vmem:[#allocation2 + $0x8] sm:$0xff] %vm342, %v327
    %345 = vst.msk [vmem:[#allocation2 + $0x10] sm:$0xff] %vm342, %v328
    %346 = vst.msk [vmem:[#allocation2 + $0x18] sm:$0xff] %vm342, %v329
    %347 = vst.msk [vmem:[#allocation2 + $0x20] sm:$0xff] %vm342, %v330
    %348 = vst.msk [vmem:[#allocation2 + $0x28] sm:$0xff] %vm342, %v331
    %349 = vst.msk [vmem:[#allocation2 + $0x30] sm:$0xff] %vm342, %v332
    %350 = vst.msk [vmem:[#allocation2 + $0x38] sm:$0xff] %vm342, %v333
    %351 = vst.msk [vmem:[#allocation2 + $0x40] sm:$0xff] %vm342, %v334
    %352 = vst.msk [vmem:[#allocation2 + $0x48] sm:$0xff] %vm342, %v335
    %353 = vst.msk [vmem:[#allocation2 + $0x50] sm:$0xff] %vm342, %v336
    %354 = vst.msk [vmem:[#allocation2 + $0x58] sm:$0xff] %vm342, %v337
    %355 = vst.msk [vmem:[#allocation2 + $0x60] sm:$0xff] %vm342, %v338
    %356 = vst.msk [vmem:[#allocation2 + $0x68] sm:$0xff] %vm342, %v339
    %357 = vst.msk [vmem:[#allocation2 + $0x70] sm:$0xff] %vm342, %v340
    %358 = vst.msk [vmem:[#allocation2 + $0x78] sm:$0xff] %vm342, %v341
    // Predicated region
    $region22: #{bottleneck_forward_pallas.5} parent=1 // pred_check
      _
    $region23: #{bottleneck_forward_pallas.5} parent=1 // pred_check_branch
      %360 = sbr.rel (0) target = $region25
    $region24: #{bottleneck_forward_pallas.5} parent=1 // pred_region
      %362 = vsyncadd [#allocation3], 0
      %s363 = sshll.u32 [#allocation2], 4
      %s364 = int_to_ptr.vmem [resolvable:$true] %s363
      %s365 = sshll.u32 %s5, 4
      %s366 = int_to_ptr.hbm [resolvable:$true] %s365
      %371 = dma.vmem_to_hbm [thread:$0]  %s364, 2048, %s366, [#allocation3], 128, 128, 8
    $region25: #{bottleneck_forward_pallas.5} parent=1 // pred_fallthru
      _
    // Predicated region
    $region26: #{bottleneck_forward_pallas.5} parent=1 // pred_check
      _
    $region27: #{bottleneck_forward_pallas.5} parent=1 // pred_check_branch
      %373 = sbr.rel (0) target = $region29
    $region28: #{bottleneck_forward_pallas.5} parent=1 // pred_region
      %375 = dma.done [#allocation3], 2048
    $region29: #{bottleneck_forward_pallas.5} parent=1 // pred_fallthru
      _
    %376 = vsyncpa [#allocation3], 1

// kernel: bottleneck_forward_pallas.4
$region0: #{bottleneck_forward_pallas.4}
  #allocation0 [shape = 'u32[]', space=smem, size = 0x4, offset = 0x4, fixed_abs, tag = 'smem constant byte address 0x4 - core index']
  #allocation1 [shape = 'u32[72,128]{1,0:T(1,128)}', space=vmem, size = 0x9000, scoped, tag = 'internal scratch']
  %s0 = inlined_call_operand.vmem [shape: bf16[2,10,10,16], index: 0, kind: input, shape index: {}]
  %s1 = inlined_call_operand.vmem [shape: bf16[9,16,16], index: 1, kind: input, shape index: {}]
  %s2 = inlined_call_operand.vmem [shape: f32[1,16], index: 2, kind: input, shape index: {}]
  %s3 = inlined_call_operand.vmem [shape: bf16[2,8,8,16], index: 3, kind: output, shape index: {}]
  %s4 = sld [smem:[#allocation0]]
  $region45: #{bottleneck_forward_pallas.4} parent=0
    _
  %s6 = ssub.s32 1, %s4
  %s7 = scalar_select 0, %s6, %s4
  loop: start=0, step=1, limit=4
  $region2: #{bottleneck_forward_pallas.4} parent=0 // loop_pre_header
    _
  $region3: #{bottleneck_forward_pallas.4} parent=0 // loop_header
    %s9 = sphi 0, %s13
    %p10 = scmp.ge.s32.totalorder %s9, 4
    %s16 = sphi 0, %s28
    %s17 = sphi 0, %s24
    %s18 = sphi 0, %s16
    %s19 = sphi 0, %s17
    %s20 = sphi 0, %s18
    %s21 = sphi 0, %s19
    %s31 = sphi 0, %s33
    %s34 = sphi 0, %s31
    %s35 = sphi 0, %s34
    %s51 = sphi 0, %s35
    %s55 = sphi 0, %s55
    %s57 = sphi 0, %s55
    %s58 = sphi 0, %s57
    %s72 = sphi 0, %s58
    %s76 = sphi 0, %s76
    %s78 = sphi 0, %s76
    %s79 = sphi 0, %s78
    %s93 = sphi 0, %s79
    %s101 = sphi 0, %s103
    %s104 = sphi 0, %s101
    %s105 = sphi 0, %s104
    %s121 = sphi 0, %s105
  $region4: #{bottleneck_forward_pallas.4} parent=0 // loop_header_branch
    %12 = sbr.rel (%p10) target = $region8
  $region5: #{bottleneck_forward_pallas.4} parent=0 // loop_body
    %s14 = ssub.s32 %s9, 1
    %s15 = ssub.s32 %s9, 2
    %s22 = sadd.s32 1, %s17
    %p23 = scmp.ge.s32.totalorder %s22, 1
    %s24 = scalar_select %p23, 0, %s22
    %s25 = sadd.s32 1, %s16
    %s26 = scalar_select %p23, %s25, %s16
    %p27 = scmp.ge.s32.totalorder %s26, 2
    %s28 = scalar_select %p27, 0, %s26
    %s29 = ssub.s32 %s16, %s28
    %p30 = scmp.eq.s32.totalorder %s29, 0
    %s32 = sadd.s32 %s31, 1
    %s33 = scalar_select %p30, %s31, %s32
    %p36 = pneg %p30
    %p37 = scmp.eq.s32.totalorder %s9, 1
    %p38 = por %p36, %p37
    %p39 = scmp.ne.s32.totalorder %s31, %s34
    %p40 = scmp.eq.s32.totalorder %s9, 0
    %p41 = por %p39, %p40
    %p42 = scmp.ne.s32.totalorder %s31, %s34
    %p43 = scmp.eq.s32.totalorder %s14, 1
    %p44 = por %p42, %p43
    %p45 = scmp.ne.s32.totalorder %s34, %s35
    %p46 = scmp.eq.s32.totalorder %s14, 0
    %p47 = por %p45, %p46
    %p48 = scmp.ne.s32.totalorder %s34, %s35
    %p49 = scmp.eq.s32.totalorder %s15, 1
    %p50 = por %p48, %p49
    %p52 = scmp.ne.s32.totalorder %s35, %s51
    %p53 = scmp.eq.s32.totalorder %s15, 0
    %p54 = por %p52, %p53
    %s56 = sadd.s32 %s55, 1
    %p59 = scmp.eq.s32.totalorder %s9, 1
    %p60 = scmp.ne.s32.totalorder %s55, %s57
    %p61 = scmp.eq.s32.totalorder %s9, 0
    %p62 = por %p60, %p61
    %p63 = scmp.ne.s32.totalorder %s55, %s57
    %p64 = scmp.eq.s32.totalorder %s14, 1
    %p65 = por %p63, %p64
    %p66 = scmp.ne.s32.totalorder %s57, %s58
    %p67 = scmp.eq.s32.totalorder %s14, 0
    %p68 = por %p66, %p67
    %p69 = scmp.ne.s32.totalorder %s57, %s58
    %p70 = scmp.eq.s32.totalorder %s15, 1
    %p71 = por %p69, %p70
    %p73 = scmp.ne.s32.totalorder %s58, %s72
    %p74 = scmp.eq.s32.totalorder %s15, 0
    %p75 = por %p73, %p74
    %s77 = sadd.s32 %s76, 1
    %p80 = scmp.eq.s32.totalorder %s9, 1
    %p81 = scmp.ne.s32.totalorder %s76, %s78
    %p82 = scmp.eq.s32.totalorder %s9, 0
    %p83 = por %p81, %p82
    %p84 = scmp.ne.s32.totalorder %s76, %s78
    %p85 = scmp.eq.s32.totalorder %s14, 1
    %p86 = por %p84, %p85
    %p87 = scmp.ne.s32.totalorder %s78, %s79
    %p88 = scmp.eq.s32.totalorder %s14, 0
    %p89 = por %p87, %p88
    %p90 = scmp.ne.s32.totalorder %s78, %s79
    %p91 = scmp.eq.s32.totalorder %s15, 1
    %p92 = por %p90, %p91
    %p94 = scmp.ne.s32.totalorder %s79, %s93
    %p95 = scmp.eq.s32.totalorder %s15, 0
    %p96 = por %p94, %p95
    %s97 = ssub.s32 %s16, %s28
    %s98 = ssub.s32 %s17, %s24
    %s99 = sor.u32 %s97, %s98
    %p100 = scmp.eq.s32.totalorder %s99, 0
    %s102 = sadd.s32 %s101, 1
    %s103 = scalar_select %p100, %s101, %s102
    %p106 = pneg %p100
    %p107 = scmp.eq.s32.totalorder %s9, 1
    %p108 = por %p106, %p107
    %p109 = scmp.ne.s32.totalorder %s101, %s104
    %p110 = scmp.eq.s32.totalorder %s9, 0
    %p111 = por %p109, %p110
    %p112 = scmp.ne.s32.totalorder %s101, %s104
    %p113 = scmp.eq.s32.totalorder %s14, 1
    %p114 = por %p112, %p113
    %p115 = scmp.ne.s32.totalorder %s104, %s105
    %p116 = scmp.eq.s32.totalorder %s14, 0
    %p117 = por %p115, %p116
    %p118 = scmp.ne.s32.totalorder %s104, %s105
    %p119 = scmp.eq.s32.totalorder %s15, 1
    %p120 = por %p118, %p119
    %p122 = scmp.ne.s32.totalorder %s105, %s121
    %p123 = scmp.eq.s32.totalorder %s15, 0
    %p124 = por %p122, %p123
    %p125 = scmp.le.s32.totalorder 1, %s9
    %p126 = scmp.lt.s32.totalorder %s9, 3
    %p127 = pnand %p125, %p126
    %p128 = pneg %p127
    // Predicated region
    $region9: #{bottleneck_forward_pallas.4} parent=5 // pred_check
      _
    $region10: #{bottleneck_forward_pallas.4} parent=5 // pred_check_branch
      %130 = sbr.rel (%p127) target = $region12
    $region11: #{bottleneck_forward_pallas.4} parent=5 // pred_region
      %s131 = ssub.s32 %s9, 1
      // Predicated region
      $region13: #{bottleneck_forward_pallas.4} parent=11 // pred_check
        %p132 = pneg %p68
      $region14: #{bottleneck_forward_pallas.4} parent=11 // pred_check_branch
        %134 = sbr.rel (%p132) target = $region16
      $region15: #{bottleneck_forward_pallas.4} parent=11 // pred_region
        _
      $region16: #{bottleneck_forward_pallas.4} parent=11 // pred_fallthru
        _
      // Predicated region
      $region17: #{bottleneck_forward_pallas.4} parent=11 // pred_check
        %p135 = pneg %p89
      $region18: #{bottleneck_forward_pallas.4} parent=11 // pred_check_branch
        %137 = sbr.rel (%p135) target = $region20
      $region19: #{bottleneck_forward_pallas.4} parent=11 // pred_region
        _
      $region20: #{bottleneck_forward_pallas.4} parent=11 // pred_fallthru
        _
    $region12: #{bottleneck_forward_pallas.4} parent=5 // pred_fallthru
      _
    %p138 = scmp.lt.s32.totalorder %s9, 2
    // Predicated region
    $region21: #{bottleneck_forward_pallas.4} parent=5 // pred_check
      %p139 = pneg %p138
    $region22: #{bottleneck_forward_pallas.4} parent=5 // pred_check_branch
      %141 = sbr.rel (%p139) target = $region24
    $region23: #{bottleneck_forward_pallas.4} parent=5 // pred_region
      // Predicated region
      $region25: #{bottleneck_forward_pallas.4} parent=23 // pred_check
        %p142 = pneg %p41
      $region26: #{bottleneck_forward_pallas.4} parent=23 // pred_check_branch
        %144 = sbr.rel (%p142) target = $region28
      $region27: #{bottleneck_forward_pallas.4} parent=23 // pred_region
        %p145 = scmp.lt.s32.totalorder %s16, 1
        %s146 = scalar_select %p145, %s16, 1
        %s147 = smul.addr %s146, 20
        %s148 = smul.addr %s147, 4
        %s149 = scalar_lea.vmem %s0, %s148
      $region28: #{bottleneck_forward_pallas.4} parent=23 // pred_fallthru
        _
    $region24: #{bottleneck_forward_pallas.4} parent=5 // pred_fallthru
      _
    %p150 = scmp.le.s32.totalorder 1, %s9
    %p151 = scmp.lt.s32.totalorder %s9, 3
    %p152 = pnand %p150, %p151
    %p153 = pneg %p152
    // Predicated region
    $region29: #{bottleneck_forward_pallas.4} parent=5 // pred_check
      _
    $region30: #{bottleneck_forward_pallas.4} parent=5 // pred_check_branch
      %155 = sbr.rel (%p152) target = $region32
    $region31: #{bottleneck_forward_pallas.4} parent=5 // pred_region
      %s156 = ssub.s32 %s9, 1
      %p157 = scmp.lt.s32.totalorder %s18, 1
      %s158 = scalar_select %p157, %s18, 1
      %s159 = smul.addr %s158, 20
      %s160 = smul.addr %s159, 4
      %s161 = scalar_lea.vmem %s0, %s160
      %p162 = pneg %p47
      %p163 = pneg %p44
      %p164 = pneg %p68
      %p165 = pneg %p65
      %p166 = pneg %p89
      %p167 = pneg %p86
      %p168 = pneg %p117
      %p169 = pneg %p114
      %s170 = smul.u32 8, %s19
      %p171 = scmp.lt.s32.totalorder %s18, 1
      %s172 = scalar_select %p171, %s18, 1
      %p173 = scmp.lt.s32.totalorder %s170, 7
      %s174 = scalar_select %p173, %s170, 7
      %s175 = smul.addr %s172, 8
      %s176 = sadd.s32 %s174, %s175
      %s177 = smul.addr %s176, 4
      %s178 = scalar_lea.vmem %s3, %s177
      %p179 = scmp.lt.s32.totalorder %s18, 1
      %s180 = scalar_select %p179, %s18, 1
      %s181 = smul.addr %s180, 20
      %s182 = smul.addr %s181, 4
      %s183 = scalar_lea.vmem %s0, %s182
      %s184 = smul.u32 8, %s19
      %p185 = scmp.lt.s32.totalorder %s18, 1
      %s186 = scalar_select %p185, %s18, 1
      %p187 = scmp.lt.s32.totalorder %s184, 7
      %s188 = scalar_select %p187, %s184, 7
      %s189 = smul.addr %s186, 8
      %s190 = sadd.s32 %s188, %s189
      %s191 = smul.addr %s190, 4
      %s192 = scalar_lea.vmem %s3, %s191
      %s193 = smul.u32 8, %s19
      %s195 = smul.u32 %s19, 8
      %s196 = smul.u32 %s195, 2
      %s197 = smul.addr %s196, 4
      %s198 = scalar_lea.vmem %s183, %s197
      %v199 = vld [vmem:[%s198] sm:$0xf]
      %v200 = vld [vmem:[%s198 + $0x8] sm:$0xf]
      %v201 = vld [vmem:[%s198 + $0x10] sm:$0xf]
      %v202 = vld [vmem:[%s198 + $0x18] sm:$0xf]
      %v203 = vld [vmem:[%s198 + $0x20] sm:$0xf]
      %v204 = vld [vmem:[%s198 + $0x28] sm:$0xf]
      %v205 = vld [vmem:[%s198 + $0x30] sm:$0xf]
      %v206 = vld [vmem:[%s198 + $0x38] sm:$0xf]
      %v207 = vld [vmem:[%s1] sm:$0xf]
      %v208 = vld [vmem:[%s1 + $0x4] sm:$0xf]
      %v209 = vld [vmem:[%s198 + $0x4] sm:$0x1]
      %v210 = vld [vmem:[%s198 + $0xc] sm:$0x1]
      %v211 = vld [vmem:[%s198 + $0x14] sm:$0x1]
      %v212 = vld [vmem:[%s198 + $0x1c] sm:$0x1]
      %v213 = vld [vmem:[%s198 + $0x24] sm:$0x1]
      %v214 = vld [vmem:[%s198 + $0x2c] sm:$0x1]
      %v215 = vld [vmem:[%s198 + $0x34] sm:$0x1]
      %v216 = vld [vmem:[%s198 + $0x3c] sm:$0x1]
      %vm217 = vsmask.f32 3328
      %vm218 = vsmask.f32 7440
      %vm219 = vmor %vm217, %vm218
      %v221 = vshrl.u32 %v199, 16
      %v223 = vrot.slane %v221, 4
      %v224 = vshll.u32 %v199, 16
      %v226 = vrot.slane %v224, 5
      %v227 = vor.u32 %v223, %v226
      %v228 = vrot.slane %v227, 4
      %v230 = vshll.u32 %v209, 16
      %v232 = vrot.slane %v230, 5
      %v233 = vsel %vm219, %v228, %v232
      %v235 = vshrl.u32 %v200, 16
      %v237 = vrot.slane %v235, 4
      %v238 = vshll.u32 %v200, 16
      %v240 = vrot.slane %v238, 5
      %v241 = vor.u32 %v237, %v240
      %v242 = vrot.slane %v241, 4
      %v244 = vshll.u32 %v210, 16
      %v246 = vrot.slane %v244, 5
      %v247 = vsel %vm219, %v242, %v246
      %v249 = vshrl.u32 %v201, 16
      %v251 = vrot.slane %v249, 4
      %v252 = vshll.u32 %v201, 16
      %v254 = vrot.slane %v252, 5
      %v255 = vor.u32 %v251, %v254
      %v256 = vrot.slane %v255, 4
      %v258 = vshll.u32 %v211, 16
      %v260 = vrot.slane %v258, 5
      %v261 = vsel %vm219, %v256, %v260
      %v263 = vshrl.u32 %v202, 16
      %v265 = vrot.slane %v263, 4
      %v266 = vshll.u32 %v202, 16
      %v268 = vrot.slane %v266, 5
      %v269 = vor.u32 %v265, %v268
      %v270 = vrot.slane %v269, 4
      %v272 = vshll.u32 %v212, 16
      %v274 = vrot.slane %v272, 5
      %v275 = vsel %vm219, %v270, %v274
      %v277 = vshrl.u32 %v203, 16
      %v279 = vrot.slane %v277, 4
      %v280 = vshll.u32 %v203, 16
      %v282 = vrot.slane %v280, 5
      %v283 = vor.u32 %v279, %v282
      %v284 = vrot.slane %v283, 4
      %v286 = vshll.u32 %v213, 16
      %v288 = vrot.slane %v286, 5
      %v289 = vsel %vm219, %v284, %v288
      %v291 = vshrl.u32 %v204, 16
      %v293 = vrot.slane %v291, 4
      %v294 = vshll.u32 %v204, 16
      %v296 = vrot.slane %v294, 5
      %v297 = vor.u32 %v293, %v296
      %v298 = vrot.slane %v297, 4
      %v300 = vshll.u32 %v214, 16
      %v302 = vrot.slane %v300, 5
      %v303 = vsel %vm219, %v298, %v302
      %v305 = vshrl.u32 %v205, 16
      %v307 = vrot.slane %v305, 4
      %v308 = vshll.u32 %v205, 16
      %v310 = vrot.slane %v308, 5
      %v311 = vor.u32 %v307, %v310
      %v312 = vrot.slane %v311, 4
      %v314 = vshll.u32 %v215, 16
      %v316 = vrot.slane %v314, 5
      %v317 = vsel %vm219, %v312, %v316
      %v319 = vshrl.u32 %v206, 16
      %v321 = vrot.slane %v319, 4
      %v322 = vshll.u32 %v206, 16
      %v324 = vrot.slane %v322, 5
      %v325 = vor.u32 %v321, %v324
      %v326 = vrot.slane %v325, 4
      %v328 = vshll.u32 %v216, 16
      %v330 = vrot.slane %v328, 5
      %v331 = vsel %vm219, %v326, %v330
      %s332 = scalar_lea.vmem %s1, 8
      %v333 = vld [vmem:[%s332] sm:$0xf]
      %v334 = vld [vmem:[%s332 + $0x4] sm:$0xf]
      %v335 = vunpack.c.l.b16 %v233
      %v336 = vunpack.c.l.b16 %v247
      %v337 = vunpack.c.l.b16 %v261
      %v338 = vunpack.c.l.b16 %v275
      %v339 = vunpack.c.l.b16 %v289
      %v340 = vunpack.c.l.b16 %v303
      %v341 = vunpack.c.l.b16 %v317
      %v342 = vunpack.c.l.b16 %v331
      %v343 = vpack.c.b16 %v336, %v335
      %v344 = vpack.c.b16 %v338, %v337
      %v345 = vpack.c.b16 %v340, %v339
      %v346 = vpack.c.b16 %v342, %v341
      %v349 = vunpack.c.l.b16 %v333
      %v350 = vunpack.c.l.b16 %v334
      %v351 = vpack.c.b16 %v350, %v349
      %vm353 = vcmask 130048
      %v355 = vsel %vm353, %v343, 0
      %v358 = vsel %vm353, %v344, 0
      %v361 = vsel %vm353, %v345, 0
      %v364 = vsel %vm353, %v346, 0
      %366 = vmatpush.bf16.msra.mxu0 0
      %367 = vmatpush.bf16.msra.mxu0 0
      %368 = vmatpush.bf16.msra.mxu0 0
      %369 = vmatpush.bf16.msra.mxu0 0
      %370 = vmatpush.bf16.msra.mxu0 0
      %371 = vmatpush.bf16.msra.mxu0 0
      %372 = vmatpush.bf16.msra.mxu0 0
      %373 = vmatpush.bf16.msra.mxu0 %v351
      %374 = vmatmul.bf16.gmra.mxu0 %v355
      %v375 = vpop.f32.mrf.mxu0
      %v376 = vadd.f32 0.0, %v375
      %v377 = vpop.f32.mrf.mxu0
      %v378 = vadd.f32 0.0, %v377
      %379 = vmatmul.bf16.gmra.mxu0 %v358
      %v380 = vpop.f32.mrf.mxu0
      %v381 = vadd.f32 0.0, %v380
      %v382 = vpop.f32.mrf.mxu0
      %v383 = vadd.f32 0.0, %v382
      %384 = vmatmul.bf16.gmra.mxu0 %v361
      %v385 = vpop.f32.mrf.mxu0
      %v386 = vadd.f32 0.0, %v385
      %v387 = vpop.f32.mrf.mxu0
      %v388 = vadd.f32 0.0, %v387
      %389 = vmatmul.bf16.gmra.mxu0 %v364
      %v390 = vpop.f32.mrf.mxu0
      %v391 = vadd.f32 0.0, %v390
      %v392 = vpop.f32.mrf.mxu0
      %v393 = vadd.f32 0.0, %v392
      %394 = vdwg.mxu0
      %v403 = vunpack.c.l.b16 %v199
      %v404 = vunpack.c.l.b16 %v200
      %v405 = vunpack.c.l.b16 %v201
      %v406 = vunpack.c.l.b16 %v202
      %v407 = vunpack.c.l.b16 %v203
      %v408 = vunpack.c.l.b16 %v204
      %v409 = vunpack.c.l.b16 %v205
      %v410 = vunpack.c.l.b16 %v206
      %v411 = vpack.c.b16 %v404, %v403
      %v412 = vpack.c.b16 %v406, %v405
      %v413 = vpack.c.b16 %v408, %v407
      %v414 = vpack.c.b16 %v410, %v409
      %v417 = vunpack.c.l.b16 %v207
      %v418 = vunpack.c.l.b16 %v208
      %v419 = vpack.c.b16 %v418, %v417
      %v422 = vsel %vm353, %v411, 0
      %v425 = vsel %vm353, %v412, 0
      %v428 = vsel %vm353, %v413, 0
      %v431 = vsel %vm353, %v414, 0
      %433 = vmatpush.bf16.msra.mxu0 0
      %434 = vmatpush.bf16.msra.mxu0 0
      %435 = vmatpush.bf16.msra.mxu0 0
      %436 = vmatpush.bf16.msra.mxu0 0
      %437 = vmatpush.bf16.msra.mxu0 0
      %438 = vmatpush.bf16.msra.mxu0 0
      %439 = vmatpush.bf16.msra.mxu0 0
      %440 = vmatpush.bf16.msra.mxu0 %v419
      %441 = vmatmul.bf16.gmra.mxu0 %v422
      %v442 = vpop.f32.mrf.mxu0
      %v443 = vadd.f32 %v376, %v442
      %v444 = vpop.f32.mrf.mxu0
      %v445 = vadd.f32 %v378, %v444
      %446 = vmatmul.bf16.gmra.mxu0 %v425
      %v447 = vpop.f32.mrf.mxu0
      %v448 = vadd.f32 %v381, %v447
      %v449 = vpop.f32.mrf.mxu0
      %v450 = vadd.f32 %v383, %v449
      %451 = vmatmul.bf16.gmra.mxu0 %v428
      %v452 = vpop.f32.mrf.mxu0
      %v453 = vadd.f32 %v386, %v452
      %v454 = vpop.f32.mrf.mxu0
      %v455 = vadd.f32 %v388, %v454
      %456 = vmatmul.bf16.gmra.mxu0 %v431
      %v457 = vpop.f32.mrf.mxu0
      %v458 = vadd.f32 %v391, %v457
      %v459 = vpop.f32.mrf.mxu0
      %v460 = vadd.f32 %v393, %v459
      %461 = vdwg.mxu0
      %v462 = vld [vmem:[%s198] sm:$0xe]
      %v463 = vld [vmem:[%s198 + $0x8] sm:$0xe]
      %v464 = vld [vmem:[%s198 + $0x10] sm:$0xe]
      %v465 = vld [vmem:[%s198 + $0x18] sm:$0xe]
      %v466 = vld [vmem:[%s198 + $0x20] sm:$0xe]
      %v467 = vld [vmem:[%s198 + $0x28] sm:$0xe]
      %v468 = vld [vmem:[%s198 + $0x30] sm:$0xe]
      %v469 = vld [vmem:[%s198 + $0x38] sm:$0xe]
      %vm486 = vcmask 1042432
      %vm487 = vcmask 1046532
      %vm488 = vmor %vm486, %vm487
      %v489 = vrot.slane %v462, 5
      %v490 = vrot.slane %v489, 4
      %v491 = vrot.slane %v209, 5
      %v492 = vsel %vm488, %v490, %v491
      %v493 = vrot.slane %v463, 5
      %v494 = vrot.slane %v493, 4
      %v495 = vrot.slane %v210, 5
      %v496 = vsel %vm488, %v494, %v495
      %v497 = vrot.slane %v464, 5
      %v498 = vrot.slane %v497, 4
      %v499 = vrot.slane %v211, 5
      %v500 = vsel %vm488, %v498, %v499
      %v501 = vrot.slane %v465, 5
      %v502 = vrot.slane %v501, 4
      %v503 = vrot.slane %v212, 5
      %v504 = vsel %vm488, %v502, %v503
      %v505 = vrot.slane %v466, 5
      %v506 = vrot.slane %v505, 4
      %v507 = vrot.slane %v213, 5
      %v508 = vsel %vm488, %v506, %v507
      %v509 = vrot.slane %v467, 5
      %v510 = vrot.slane %v509, 4
      %v511 = vrot.slane %v214, 5
      %v512 = vsel %vm488, %v510, %v511
      %v513 = vrot.slane %v468, 5
      %v514 = vrot.slane %v513, 4
      %v515 = vrot.slane %v215, 5
      %v516 = vsel %vm488, %v514, %v515
      %v517 = vrot.slane %v469, 5
      %v518 = vrot.slane %v517, 4
      %v519 = vrot.slane %v216, 5
      %v520 = vsel %vm488, %v518, %v519
      %s521 = scalar_lea.vmem %s1, 16
      %v522 = vld [vmem:[%s521] sm:$0xf]
      %v523 = vld [vmem:[%s521 + $0x4] sm:$0xf]
      %v524 = vunpack.c.l.b16 %v492
      %v525 = vunpack.c.l.b16 %v496
      %v526 = vunpack.c.l.b16 %v500
      %v527 = vunpack.c.l.b16 %v504
      %v528 = vunpack.c.l.b16 %v508
      %v529 = vunpack.c.l.b16 %v512
      %v530 = vunpack.c.l.b16 %v516
      %v531 = vunpack.c.l.b16 %v520
      %v532 = vpack.c.b16 %v525, %v524
      %v533 = vpack.c.b16 %v527, %v526
      %v534 = vpack.c.b16 %v529, %v528
      %v535 = vpack.c.b16 %v531, %v530
      %v538 = vunpack.c.l.b16 %v522
      %v539 = vunpack.c.l.b16 %v523
      %v540 = vpack.c.b16 %v539, %v538
      %v543 = vsel %vm353, %v532, 0
      %v546 = vsel %vm353, %v533, 0
      %v549 = vsel %vm353, %v534, 0
      %v552 = vsel %vm353, %v535, 0
      %554 = vmatpush.bf16.msra.mxu0 0
      %555 = vmatpush.bf16.msra.mxu0 0
      %556 = vmatpush.bf16.msra.mxu0 0
      %557 = vmatpush.bf16.msra.mxu0 0
      %558 = vmatpush.bf16.msra.mxu0 0
      %559 = vmatpush.bf16.msra.mxu0 0
      %560 = vmatpush.bf16.msra.mxu0 0
      %561 = vmatpush.bf16.msra.mxu0 %v540
      %562 = vmatmul.bf16.gmra.mxu0 %v543
      %v563 = vpop.f32.mrf.mxu0
      %v564 = vadd.f32 0.0, %v563
      %v565 = vpop.f32.mrf.mxu0
      %v566 = vadd.f32 0.0, %v565
      %567 = vmatmul.bf16.gmra.mxu0 %v546
      %v568 = vpop.f32.mrf.mxu0
      %v569 = vadd.f32 0.0, %v568
      %v570 = vpop.f32.mrf.mxu0
      %v571 = vadd.f32 0.0, %v570
      %572 = vmatmul.bf16.gmra.mxu0 %v549
      %v573 = vpop.f32.mrf.mxu0
      %v574 = vadd.f32 0.0, %v573
      %v575 = vpop.f32.mrf.mxu0
      %v576 = vadd.f32 0.0, %v575
      %577 = vmatmul.bf16.gmra.mxu0 %v552
      %v578 = vpop.f32.mrf.mxu0
      %v579 = vadd.f32 0.0, %v578
      %v580 = vpop.f32.mrf.mxu0
      %v581 = vadd.f32 0.0, %v580
      %582 = vdwg.mxu0
      %v583 = vadd.f32 %v443, %v564
      %v584 = vadd.f32 %v445, %v566
      %v585 = vadd.f32 %v448, %v569
      %v586 = vadd.f32 %v450, %v571
      %v587 = vadd.f32 %v453, %v574
      %v588 = vadd.f32 %v455, %v576
      %v589 = vadd.f32 %v458, %v579
      %v590 = vadd.f32 %v460, %v581
      %s591 = sadd.s32 %s195, 1
      %s592 = smul.u32 %s591, 2
      %s593 = smul.addr %s592, 4
      %s594 = scalar_lea.vmem %s183, %s593
      %v595 = vld [vmem:[%s594] sm:$0xf]
      %v596 = vld [vmem:[%s594 + $0x8] sm:$0xf]
      %v597 = vld [vmem:[%s594 + $0x10] sm:$0xf]
      %v598 = vld [vmem:[%s594 + $0x18] sm:$0xf]
      %v599 = vld [vmem:[%s594 + $0x20] sm:$0xf]
      %v600 = vld [vmem:[%s594 + $0x28] sm:$0xf]
      %v601 = vld [vmem:[%s594 + $0x30] sm:$0xf]
      %v602 = vld [vmem:[%s594 + $0x38] sm:$0xf]
      %s603 = scalar_lea.vmem %s1, 24
      %v604 = vld [vmem:[%s603] sm:$0xf]
      %v605 = vld [vmem:[%s603 + $0x4] sm:$0xf]
      %v614 = vunpack.c.l.b16 %v595
      %v615 = vunpack.c.l.b16 %v596
      %v616 = vunpack.c.l.b16 %v597
      %v617 = vunpack.c.l.b16 %v598
      %v618 = vunpack.c.l.b16 %v599
      %v619 = vunpack.c.l.b16 %v600
      %v620 = vunpack.c.l.b16 %v601
      %v621 = vunpack.c.l.b16 %v602
      %v622 = vpack.c.b16 %v615, %v614
      %v623 = vpack.c.b16 %v617, %v616
      %v624 = vpack.c.b16 %v619, %v618
      %v625 = vpack.c.b16 %v621, %v620
      %v628 = vunpack.c.l.b16 %v604
      %v629 = vunpack.c.l.b16 %v605
      %v630 = vpack.c.b16 %v629, %v628
      %v633 = vsel %vm353, %v622, 0
      %v636 = vsel %vm353, %v623, 0
      %v639 = vsel %vm353, %v624, 0
      %v642 = vsel %vm353, %v625, 0
      %644 = vmatpush.bf16.msra.mxu0 0
      %645 = vmatpush.bf16.msra.mxu0 0
      %646 = vmatpush.bf16.msra.mxu0 0
      %647 = vmatpush.bf16.msra.mxu0 0
      %648 = vmatpush.bf16.msra.mxu0 0
      %649 = vmatpush.bf16.msra.mxu0 0
      %650 = vmatpush.bf16.msra.mxu0 0
      %651 = vmatpush.bf16.msra.mxu0 %v630
      %652 = vmatmul.bf16.gmra.mxu0 %v633
      %v653 = vpop.f32.mrf.mxu0
      %v654 = vadd.f32 0.0, %v653
      %v655 = vpop.f32.mrf.mxu0
      %v656 = vadd.f32 0.0, %v655
      %657 = vmatmul.bf16.gmra.mxu0 %v636
      %v658 = vpop.f32.mrf.mxu0
      %v659 = vadd.f32 0.0, %v658
      %v660 = vpop.f32.mrf.mxu0
      %v661 = vadd.f32 0.0, %v660
      %662 = vmatmul.bf16.gmra.mxu0 %v639
      %v663 = vpop.f32.mrf.mxu0
      %v664 = vadd.f32 0.0, %v663
      %v665 = vpop.f32.mrf.mxu0
      %v666 = vadd.f32 0.0, %v665
      %667 = vmatmul.bf16.gmra.mxu0 %v642
      %v668 = vpop.f32.mrf.mxu0
      %v669 = vadd.f32 0.0, %v668
      %v670 = vpop.f32.mrf.mxu0
      %v671 = vadd.f32 0.0, %v670
      %672 = vdwg.mxu0
      %v673 = vadd.f32 %v583, %v654
      %v674 = vadd.f32 %v584, %v656
      %v675 = vadd.f32 %v585, %v659
      %v676 = vadd.f32 %v586, %v661
      %v677 = vadd.f32 %v587, %v664
      %v678 = vadd.f32 %v588, %v666
      %v679 = vadd.f32 %v589, %v669
      %v680 = vadd.f32 %v590, %v671
      %v681 = vld [vmem:[%s594] sm:$0xf]
      %v682 = vld [vmem:[%s594 + $0x4] sm:$0x1]
      %v683 = vld [vmem:[%s594 + $0x8] sm:$0xf]
      %v684 = vld [vmem:[%s594 + $0xc] sm:$0x1]
      %v685 = vld [vmem:[%s594 + $0x10] sm:$0xf]
      %v686 = vld [vmem:[%s594 + $0x14] sm:$0x1]
      %v687 = vld [vmem:[%s594 + $0x18] sm:$0xf]
      %v688 = vld [vmem:[%s594 + $0x1c] sm:$0x1]
      %v689 = vld [vmem:[%s594 + $0x20] sm:$0xf]
      %v690 = vld [vmem:[%s594 + $0x24] sm:$0x1]
      %v691 = vld [vmem:[%s594 + $0x28] sm:$0xf]
      %v692 = vld [vmem:[%s594 + $0x2c] sm:$0x1]
      %v693 = vld [vmem:[%s594 + $0x30] sm:$0xf]
      %v694 = vld [vmem:[%s594 + $0x34] sm:$0x1]
      %v695 = vld [vmem:[%s594 + $0x38] sm:$0xf]
      %v696 = vld [vmem:[%s594 + $0x3c] sm:$0x1]
      %v698 = vshrl.u32 %v681, 16
      %v700 = vrot.slane %v698, 4
      %v701 = vshll.u32 %v681, 16
      %v703 = vrot.slane %v701, 5
      %v704 = vor.u32 %v700, %v703
      %v705 = vrot.slane %v704, 4
      %v707 = vshll.u32 %v682, 16
      %v709 = vrot.slane %v707, 5
      %v710 = vsel %vm219, %v705, %v709
      %v712 = vshrl.u32 %v683, 16
      %v714 = vrot.slane %v712, 4
      %v715 = vshll.u32 %v683, 16
      %v717 = vrot.slane %v715, 5
      %v718 = vor.u32 %v714, %v717
      %v719 = vrot.slane %v718, 4
      %v721 = vshll.u32 %v684, 16
      %v723 = vrot.slane %v721, 5
      %v724 = vsel %vm219, %v719, %v723
      %v726 = vshrl.u32 %v685, 16
      %v728 = vrot.slane %v726, 4
      %v729 = vshll.u32 %v685, 16
      %v731 = vrot.slane %v729, 5
      %v732 = vor.u32 %v728, %v731
      %v733 = vrot.slane %v732, 4
      %v735 = vshll.u32 %v686, 16
      %v737 = vrot.slane %v735, 5
      %v738 = vsel %vm219, %v733, %v737
      %v740 = vshrl.u32 %v687, 16
      %v742 = vrot.slane %v740, 4
      %v743 = vshll.u32 %v687, 16
      %v745 = vrot.slane %v743, 5
      %v746 = vor.u32 %v742, %v745
      %v747 = vrot.slane %v746, 4
      %v749 = vshll.u32 %v688, 16
      %v751 = vrot.slane %v749, 5
      %v752 = vsel %vm219, %v747, %v751
      %v754 = vshrl.u32 %v689, 16
      %v756 = vrot.slane %v754, 4
      %v757 = vshll.u32 %v689, 16
      %v759 = vrot.slane %v757, 5
      %v760 = vor.u32 %v756, %v759
      %v761 = vrot.slane %v760, 4
      %v763 = vshll.u32 %v690, 16
      %v765 = vrot.slane %v763, 5
      %v766 = vsel %vm219, %v761, %v765
      %v768 = vshrl.u32 %v691, 16
      %v770 = vrot.slane %v768, 4
      %v771 = vshll.u32 %v691, 16
      %v773 = vrot.slane %v771, 5
      %v774 = vor.u32 %v770, %v773
      %v775 = vrot.slane %v774, 4
      %v777 = vshll.u32 %v692, 16
      %v779 = vrot.slane %v777, 5
      %v780 = vsel %vm219, %v775, %v779
      %v782 = vshrl.u32 %v693, 16
      %v784 = vrot.slane %v782, 4
      %v785 = vshll.u32 %v693, 16
      %v787 = vrot.slane %v785, 5
      %v788 = vor.u32 %v784, %v787
      %v789 = vrot.slane %v788, 4
      %v791 = vshll.u32 %v694, 16
      %v793 = vrot.slane %v791, 5
      %v794 = vsel %vm219, %v789, %v793
      %v796 = vshrl.u32 %v695, 16
      %v798 = vrot.slane %v796, 4
      %v799 = vshll.u32 %v695, 16
      %v801 = vrot.slane %v799, 5
      %v802 = vor.u32 %v798, %v801
      %v803 = vrot.slane %v802, 4
      %v805 = vshll.u32 %v696, 16
      %v807 = vrot.slane %v805, 5
      %v808 = vsel %vm219, %v803, %v807
      %s809 = scalar_lea.vmem %s1, 32
      %v810 = vld [vmem:[%s809] sm:$0xf]
      %v811 = vld [vmem:[%s809 + $0x4] sm:$0xf]
      %v812 = vunpack.c.l.b16 %v710
      %v813 = vunpack.c.l.b16 %v724
      %v814 = vunpack.c.l.b16 %v738
      %v815 = vunpack.c.l.b16 %v752
      %v816 = vunpack.c.l.b16 %v766
      %v817 = vunpack.c.l.b16 %v780
      %v818 = vunpack.c.l.b16 %v794
      %v819 = vunpack.c.l.b16 %v808
      %v820 = vpack.c.b16 %v813, %v812
      %v821 = vpack.c.b16 %v815, %v814
      %v822 = vpack.c.b16 %v817, %v816
      %v823 = vpack.c.b16 %v819, %v818
      %v826 = vunpack.c.l.b16 %v810
      %v827 = vunpack.c.l.b16 %v811
      %v828 = vpack.c.b16 %v827, %v826
      %v831 = vsel %vm353, %v820, 0
      %v834 = vsel %vm353, %v821, 0
      %v837 = vsel %vm353, %v822, 0
      %v840 = vsel %vm353, %v823, 0
      %842 = vmatpush.bf16.msra.mxu0 0
      %843 = vmatpush.bf16.msra.mxu0 0
      %844 = vmatpush.bf16.msra.mxu0 0
      %845 = vmatpush.bf16.msra.mxu0 0
      %846 = vmatpush.bf16.msra.mxu0 0
      %847 = vmatpush.bf16.msra.mxu0 0
      %848 = vmatpush.bf16.msra.mxu0 0
      %849 = vmatpush.bf16.msra.mxu0 %v828
      %850 = vmatmul.bf16.gmra.mxu0 %v831
      %v851 = vpop.f32.mrf.mxu0
      %v852 = vadd.f32 0.0, %v851
      %v853 = vpop.f32.mrf.mxu0
      %v854 = vadd.f32 0.0, %v853
      %855 = vmatmul.bf16.gmra.mxu0 %v834
      %v856 = vpop.f32.mrf.mxu0
      %v857 = vadd.f32 0.0, %v856
      %v858 = vpop.f32.mrf.mxu0
      %v859 = vadd.f32 0.0, %v858
      %860 = vmatmul.bf16.gmra.mxu0 %v837
      %v861 = vpop.f32.mrf.mxu0
      %v862 = vadd.f32 0.0, %v861
      %v863 = vpop.f32.mrf.mxu0
      %v864 = vadd.f32 0.0, %v863
      %865 = vmatmul.bf16.gmra.mxu0 %v840
      %v866 = vpop.f32.mrf.mxu0
      %v867 = vadd.f32 0.0, %v866
      %v868 = vpop.f32.mrf.mxu0
      %v869 = vadd.f32 0.0, %v868
      %870 = vdwg.mxu0
      %v871 = vadd.f32 %v673, %v852
      %v872 = vadd.f32 %v674, %v854
      %v873 = vadd.f32 %v675, %v857
      %v874 = vadd.f32 %v676, %v859
      %v875 = vadd.f32 %v677, %v862
      %v876 = vadd.f32 %v678, %v864
      %v877 = vadd.f32 %v679, %v867
      %v878 = vadd.f32 %v680, %v869
      %v879 = vld [vmem:[%s594] sm:$0xe]
      %v880 = vld [vmem:[%s594 + $0x8] sm:$0xe]
      %v881 = vld [vmem:[%s594 + $0x10] sm:$0xe]
      %v882 = vld [vmem:[%s594 + $0x18] sm:$0xe]
      %v883 = vld [vmem:[%s594 + $0x20] sm:$0xe]
      %v884 = vld [vmem:[%s594 + $0x28] sm:$0xe]
      %v885 = vld [vmem:[%s594 + $0x30] sm:$0xe]
      %v886 = vld [vmem:[%s594 + $0x38] sm:$0xe]
      %v903 = vrot.slane %v879, 5
      %v904 = vrot.slane %v903, 4
      %v905 = vrot.slane %v682, 5
      %v906 = vsel %vm488, %v904, %v905
      %v907 = vrot.slane %v880, 5
      %v908 = vrot.slane %v907, 4
      %v909 = vrot.slane %v684, 5
      %v910 = vsel %vm488, %v908, %v909
      %v911 = vrot.slane %v881, 5
      %v912 = vrot.slane %v911, 4
      %v913 = vrot.slane %v686, 5
      %v914 = vsel %vm488, %v912, %v913
      %v915 = vrot.slane %v882, 5
      %v916 = vrot.slane %v915, 4
      %v917 = vrot.slane %v688, 5
      %v918 = vsel %vm488, %v916, %v917
      %v919 = vrot.slane %v883, 5
      %v920 = vrot.slane %v919, 4
      %v921 = vrot.slane %v690, 5
      %v922 = vsel %vm488, %v920, %v921
      %v923 = vrot.slane %v884, 5
      %v924 = vrot.slane %v923, 4
      %v925 = vrot.slane %v692, 5
      %v926 = vsel %vm488, %v924, %v925
      %v927 = vrot.slane %v885, 5
      %v928 = vrot.slane %v927, 4
      %v929 = vrot.slane %v694, 5
      %v930 = vsel %vm488, %v928, %v929
      %v931 = vrot.slane %v886, 5
      %v932 = vrot.slane %v931, 4
      %v933 = vrot.slane %v696, 5
      %v934 = vsel %vm488, %v932, %v933
      %s935 = scalar_lea.vmem %s1, 40
      %v936 = vld [vmem:[%s935] sm:$0xf]
      %v937 = vld [vmem:[%s935 + $0x4] sm:$0xf]
      %v938 = vunpack.c.l.b16 %v906
      %v939 = vunpack.c.l.b16 %v910
      %v940 = vunpack.c.l.b16 %v914
      %v941 = vunpack.c.l.b16 %v918
      %v942 = vunpack.c.l.b16 %v922
      %v943 = vunpack.c.l.b16 %v926
      %v944 = vunpack.c.l.b16 %v930
      %v945 = vunpack.c.l.b16 %v934
      %v946 = vpack.c.b16 %v939, %v938
      %v947 = vpack.c.b16 %v941, %v940
      %v948 = vpack.c.b16 %v943, %v942
      %v949 = vpack.c.b16 %v945, %v944
      %v952 = vunpack.c.l.b16 %v936
      %v953 = vunpack.c.l.b16 %v937
      %v954 = vpack.c.b16 %v953, %v952
      %v957 = vsel %vm353, %v946, 0
      %v960 = vsel %vm353, %v947, 0
      %v963 = vsel %vm353, %v948, 0
      %v966 = vsel %vm353, %v949, 0
      %968 = vmatpush.bf16.msra.mxu0 0
      %969 = vmatpush.bf16.msra.mxu0 0
      %970 = vmatpush.bf16.msra.mxu0 0
      %971 = vmatpush.bf16.msra.mxu0 0
      %972 = vmatpush.bf16.msra.mxu0 0
      %973 = vmatpush.bf16.msra.mxu0 0
      %974 = vmatpush.bf16.msra.mxu0 0
      %975 = vmatpush.bf16.msra.mxu0 %v954
      %976 = vmatmul.bf16.gmra.mxu0 %v957
      %v977 = vpop.f32.mrf.mxu0
      %v978 = vadd.f32 0.0, %v977
      %v979 = vpop.f32.mrf.mxu0
      %v980 = vadd.f32 0.0, %v979
      %981 = vmatmul.bf16.gmra.mxu0 %v960
      %v982 = vpop.f32.mrf.mxu0
      %v983 = vadd.f32 0.0, %v982
      %v984 = vpop.f32.mrf.mxu0
      %v985 = vadd.f32 0.0, %v984
      %986 = vmatmul.bf16.gmra.mxu0 %v963
      %v987 = vpop.f32.mrf.mxu0
      %v988 = vadd.f32 0.0, %v987
      %v989 = vpop.f32.mrf.mxu0
      %v990 = vadd.f32 0.0, %v989
      %991 = vmatmul.bf16.gmra.mxu0 %v966
      %v992 = vpop.f32.mrf.mxu0
      %v993 = vadd.f32 0.0, %v992
      %v994 = vpop.f32.mrf.mxu0
      %v995 = vadd.f32 0.0, %v994
      %996 = vdwg.mxu0
      %v997 = vadd.f32 %v871, %v978
      %v998 = vadd.f32 %v872, %v980
      %v999 = vadd.f32 %v873, %v983
      %v1000 = vadd.f32 %v874, %v985
      %v1001 = vadd.f32 %v875, %v988
      %v1002 = vadd.f32 %v876, %v990
      %v1003 = vadd.f32 %v877, %v993
      %v1004 = vadd.f32 %v878, %v995
      %s1005 = sadd.s32 %s195, 2
      %s1006 = smul.u32 %s1005, 2
      %s1007 = smul.addr %s1006, 4
      %s1008 = scalar_lea.vmem %s183, %s1007
      %v1009 = vld [vmem:[%s1008] sm:$0xf]
      %v1010 = vld [vmem:[%s1008 + $0x8] sm:$0xf]
      %v1011 = vld [vmem:[%s1008 + $0x10] sm:$0xf]
      %v1012 = vld [vmem:[%s1008 + $0x18] sm:$0xf]
      %v1013 = vld [vmem:[%s1008 + $0x20] sm:$0xf]
      %v1014 = vld [vmem:[%s1008 + $0x28] sm:$0xf]
      %v1015 = vld [vmem:[%s1008 + $0x30] sm:$0xf]
      %v1016 = vld [vmem:[%s1008 + $0x38] sm:$0xf]
      %s1017 = scalar_lea.vmem %s1, 48
      %v1018 = vld [vmem:[%s1017] sm:$0xf]
      %v1019 = vld [vmem:[%s1017 + $0x4] sm:$0xf]
      %v1028 = vunpack.c.l.b16 %v1009
      %v1029 = vunpack.c.l.b16 %v1010
      %v1030 = vunpack.c.l.b16 %v1011
      %v1031 = vunpack.c.l.b16 %v1012
      %v1032 = vunpack.c.l.b16 %v1013
      %v1033 = vunpack.c.l.b16 %v1014
      %v1034 = vunpack.c.l.b16 %v1015
      %v1035 = vunpack.c.l.b16 %v1016
      %v1036 = vpack.c.b16 %v1029, %v1028
      %v1037 = vpack.c.b16 %v1031, %v1030
      %v1038 = vpack.c.b16 %v1033, %v1032
      %v1039 = vpack.c.b16 %v1035, %v1034
      %v1042 = vunpack.c.l.b16 %v1018
      %v1043 = vunpack.c.l.b16 %v1019
      %v1044 = vpack.c.b16 %v1043, %v1042
      %v1047 = vsel %vm353, %v1036, 0
      %v1050 = vsel %vm353, %v1037, 0
      %v1053 = vsel %vm353, %v1038, 0
      %v1056 = vsel %vm353, %v1039, 0
      %1058 = vmatpush.bf16.msra.mxu0 0
      %1059 = vmatpush.bf16.msra.mxu0 0
      %1060 = vmatpush.bf16.msra.mxu0 0
      %1061 = vmatpush.bf16.msra.mxu0 0
      %1062 = vmatpush.bf16.msra.mxu0 0
      %1063 = vmatpush.bf16.msra.mxu0 0
      %1064 = vmatpush.bf16.msra.mxu0 0
      %1065 = vmatpush.bf16.msra.mxu0 %v1044
      %1066 = vmatmul.bf16.gmra.mxu0 %v1047
      %v1067 = vpop.f32.mrf.mxu0
      %v1068 = vadd.f32 0.0, %v1067
      %v1069 = vpop.f32.mrf.mxu0
      %v1070 = vadd.f32 0.0, %v1069
      %1071 = vmatmul.bf16.gmra.mxu0 %v1050
      %v1072 = vpop.f32.mrf.mxu0
      %v1073 = vadd.f32 0.0, %v1072
      %v1074 = vpop.f32.mrf.mxu0
      %v1075 = vadd.f32 0.0, %v1074
      %1076 = vmatmul.bf16.gmra.mxu0 %v1053
      %v1077 = vpop.f32.mrf.mxu0
      %v1078 = vadd.f32 0.0, %v1077
      %v1079 = vpop.f32.mrf.mxu0
      %v1080 = vadd.f32 0.0, %v1079
      %1081 = vmatmul.bf16.gmra.mxu0 %v1056
      %v1082 = vpop.f32.mrf.mxu0
      %v1083 = vadd.f32 0.0, %v1082
      %v1084 = vpop.f32.mrf.mxu0
      %v1085 = vadd.f32 0.0, %v1084
      %1086 = vdwg.mxu0
      %v1087 = vadd.f32 %v997, %v1068
      %v1088 = vadd.f32 %v998, %v1070
      %v1089 = vadd.f32 %v999, %v1073
      %v1090 = vadd.f32 %v1000, %v1075
      %v1091 = vadd.f32 %v1001, %v1078
      %v1092 = vadd.f32 %v1002, %v1080
      %v1093 = vadd.f32 %v1003, %v1083
      %v1094 = vadd.f32 %v1004, %v1085
      %v1095 = vld [vmem:[%s1008] sm:$0xf]
      %v1096 = vld [vmem:[%s1008 + $0x4] sm:$0x1]
      %v1097 = vld [vmem:[%s1008 + $0x8] sm:$0xf]
      %v1098 = vld [vmem:[%s1008 + $0xc] sm:$0x1]
      %v1099 = vld [vmem:[%s1008 + $0x10] sm:$0xf]
      %v1100 = vld [vmem:[%s1008 + $0x14] sm:$0x1]
      %v1101 = vld [vmem:[%s1008 + $0x18] sm:$0xf]
      %v1102 = vld [vmem:[%s1008 + $0x1c] sm:$0x1]
      %v1103 = vld [vmem:[%s1008 + $0x20] sm:$0xf]
      %v1104 = vld [vmem:[%s1008 + $0x24] sm:$0x1]
      %v1105 = vld [vmem:[%s1008 + $0x28] sm:$0xf]
      %v1106 = vld [vmem:[%s1008 + $0x2c] sm:$0x1]
      %v1107 = vld [vmem:[%s1008 + $0x30] sm:$0xf]
      %v1108 = vld [vmem:[%s1008 + $0x34] sm:$0x1]
      %v1109 = vld [vmem:[%s1008 + $0x38] sm:$0xf]
      %v1110 = vld [vmem:[%s1008 + $0x3c] sm:$0x1]
      %v1112 = vshrl.u32 %v1095, 16
      %v1114 = vrot.slane %v1112, 4
      %v1115 = vshll.u32 %v1095, 16
      %v1117 = vrot.slane %v1115, 5
      %v1118 = vor.u32 %v1114, %v1117
      %v1119 = vrot.slane %v1118, 4
      %v1121 = vshll.u32 %v1096, 16
      %v1123 = vrot.slane %v1121, 5
      %v1124 = vsel %vm219, %v1119, %v1123
      %v1126 = vshrl.u32 %v1097, 16
      %v1128 = vrot.slane %v1126, 4
      %v1129 = vshll.u32 %v1097, 16
      %v1131 = vrot.slane %v1129, 5
      %v1132 = vor.u32 %v1128, %v1131
      %v1133 = vrot.slane %v1132, 4
      %v1135 = vshll.u32 %v1098, 16
      %v1137 = vrot.slane %v1135, 5
      %v1138 = vsel %vm219, %v1133, %v1137
      %v1140 = vshrl.u32 %v1099, 16
      %v1142 = vrot.slane %v1140, 4
      %v1143 = vshll.u32 %v1099, 16
      %v1145 = vrot.slane %v1143, 5
      %v1146 = vor.u32 %v1142, %v1145
      %v1147 = vrot.slane %v1146, 4
      %v1149 = vshll.u32 %v1100, 16
      %v1151 = vrot.slane %v1149, 5
      %v1152 = vsel %vm219, %v1147, %v1151
      %v1154 = vshrl.u32 %v1101, 16
      %v1156 = vrot.slane %v1154, 4
      %v1157 = vshll.u32 %v1101, 16
      %v1159 = vrot.slane %v1157, 5
      %v1160 = vor.u32 %v1156, %v1159
      %v1161 = vrot.slane %v1160, 4
      %v1163 = vshll.u32 %v1102, 16
      %v1165 = vrot.slane %v1163, 5
      %v1166 = vsel %vm219, %v1161, %v1165
      %v1168 = vshrl.u32 %v1103, 16
      %v1170 = vrot.slane %v1168, 4
      %v1171 = vshll.u32 %v1103, 16
      %v1173 = vrot.slane %v1171, 5
      %v1174 = vor.u32 %v1170, %v1173
      %v1175 = vrot.slane %v1174, 4
      %v1177 = vshll.u32 %v1104, 16
      %v1179 = vrot.slane %v1177, 5
      %v1180 = vsel %vm219, %v1175, %v1179
      %v1182 = vshrl.u32 %v1105, 16
      %v1184 = vrot.slane %v1182, 4
      %v1185 = vshll.u32 %v1105, 16
      %v1187 = vrot.slane %v1185, 5
      %v1188 = vor.u32 %v1184, %v1187
      %v1189 = vrot.slane %v1188, 4
      %v1191 = vshll.u32 %v1106, 16
      %v1193 = vrot.slane %v1191, 5
      %v1194 = vsel %vm219, %v1189, %v1193
      %v1196 = vshrl.u32 %v1107, 16
      %v1198 = vrot.slane %v1196, 4
      %v1199 = vshll.u32 %v1107, 16
      %v1201 = vrot.slane %v1199, 5
      %v1202 = vor.u32 %v1198, %v1201
      %v1203 = vrot.slane %v1202, 4
      %v1205 = vshll.u32 %v1108, 16
      %v1207 = vrot.slane %v1205, 5
      %v1208 = vsel %vm219, %v1203, %v1207
      %v1210 = vshrl.u32 %v1109, 16
      %v1212 = vrot.slane %v1210, 4
      %v1213 = vshll.u32 %v1109, 16
      %v1215 = vrot.slane %v1213, 5
      %v1216 = vor.u32 %v1212, %v1215
      %v1217 = vrot.slane %v1216, 4
      %v1219 = vshll.u32 %v1110, 16
      %v1221 = vrot.slane %v1219, 5
      %v1222 = vsel %vm219, %v1217, %v1221
      %s1223 = scalar_lea.vmem %s1, 56
      %v1224 = vld [vmem:[%s1223] sm:$0xf]
      %v1225 = vld [vmem:[%s1223 + $0x4] sm:$0xf]
      %v1226 = vunpack.c.l.b16 %v1124
      %v1227 = vunpack.c.l.b16 %v1138
      %v1228 = vunpack.c.l.b16 %v1152
      %v1229 = vunpack.c.l.b16 %v1166
      %v1230 = vunpack.c.l.b16 %v1180
      %v1231 = vunpack.c.l.b16 %v1194
      %v1232 = vunpack.c.l.b16 %v1208
      %v1233 = vunpack.c.l.b16 %v1222
      %v1234 = vpack.c.b16 %v1227, %v1226
      %v1235 = vpack.c.b16 %v1229, %v1228
      %v1236 = vpack.c.b16 %v1231, %v1230
      %v1237 = vpack.c.b16 %v1233, %v1232
      %v1240 = vunpack.c.l.b16 %v1224
      %v1241 = vunpack.c.l.b16 %v1225
      %v1242 = vpack.c.b16 %v1241, %v1240
      %v1245 = vsel %vm353, %v1234, 0
      %v1248 = vsel %vm353, %v1235, 0
      %v1251 = vsel %vm353, %v1236, 0
      %v1254 = vsel %vm353, %v1237, 0
      %1256 = vmatpush.bf16.msra.mxu0 0
      %1257 = vmatpush.bf16.msra.mxu0 0
      %1258 = vmatpush.bf16.msra.mxu0 0
      %1259 = vmatpush.bf16.msra.mxu0 0
      %1260 = vmatpush.bf16.msra.mxu0 0
      %1261 = vmatpush.bf16.msra.mxu0 0
      %1262 = vmatpush.bf16.msra.mxu0 0
      %1263 = vmatpush.bf16.msra.mxu0 %v1242
      %1264 = vmatmul.bf16.gmra.mxu0 %v1245
      %v1265 = vpop.f32.mrf.mxu0
      %v1266 = vadd.f32 0.0, %v1265
      %v1267 = vpop.f32.mrf.mxu0
      %v1268 = vadd.f32 0.0, %v1267
      %1269 = vmatmul.bf16.gmra.mxu0 %v1248
      %v1270 = vpop.f32.mrf.mxu0
      %v1271 = vadd.f32 0.0, %v1270
      %v1272 = vpop.f32.mrf.mxu0
      %v1273 = vadd.f32 0.0, %v1272
      %1274 = vmatmul.bf16.gmra.mxu0 %v1251
      %v1275 = vpop.f32.mrf.mxu0
      %v1276 = vadd.f32 0.0, %v1275
      %v1277 = vpop.f32.mrf.mxu0
      %v1278 = vadd.f32 0.0, %v1277
      %1279 = vmatmul.bf16.gmra.mxu0 %v1254
      %v1280 = vpop.f32.mrf.mxu0
      %v1281 = vadd.f32 0.0, %v1280
      %v1282 = vpop.f32.mrf.mxu0
      %v1283 = vadd.f32 0.0, %v1282
      %1284 = vdwg.mxu0
      %v1285 = vadd.f32 %v1087, %v1266
      %v1286 = vadd.f32 %v1088, %v1268
      %v1287 = vadd.f32 %v1089, %v1271
      %v1288 = vadd.f32 %v1090, %v1273
      %v1289 = vadd.f32 %v1091, %v1276
      %v1290 = vadd.f32 %v1092, %v1278
      %v1291 = vadd.f32 %v1093, %v1281
      %v1292 = vadd.f32 %v1094, %v1283
      %v1293 = vld [vmem:[%s1008] sm:$0xe]
      %v1294 = vld [vmem:[%s1008 + $0x8] sm:$0xe]
      %v1295 = vld [vmem:[%s1008 + $0x10] sm:$0xe]
      %v1296 = vld [vmem:[%s1008 + $0x18] sm:$0xe]
      %v1297 = vld [vmem:[%s1008 + $0x20] sm:$0xe]
      %v1298 = vld [vmem:[%s1008 + $0x28] sm:$0xe]
      %v1299 = vld [vmem:[%s1008 + $0x30] sm:$0xe]
      %v1300 = vld [vmem:[%s1008 + $0x38] sm:$0xe]
      %v1317 = vrot.slane %v1293, 5
      %v1318 = vrot.slane %v1317, 4
      %v1319 = vrot.slane %v1096, 5
      %v1320 = vsel %vm488, %v1318, %v1319
      %v1321 = vrot.slane %v1294, 5
      %v1322 = vrot.slane %v1321, 4
      %v1323 = vrot.slane %v1098, 5
      %v1324 = vsel %vm488, %v1322, %v1323
      %v1325 = vrot.slane %v1295, 5
      %v1326 = vrot.slane %v1325, 4
      %v1327 = vrot.slane %v1100, 5
      %v1328 = vsel %vm488, %v1326, %v1327
      %v1329 = vrot.slane %v1296, 5
      %v1330 = vrot.slane %v1329, 4
      %v1331 = vrot.slane %v1102, 5
      %v1332 = vsel %vm488, %v1330, %v1331
      %v1333 = vrot.slane %v1297, 5
      %v1334 = vrot.slane %v1333, 4
      %v1335 = vrot.slane %v1104, 5
      %v1336 = vsel %vm488, %v1334, %v1335
      %v1337 = vrot.slane %v1298, 5
      %v1338 = vrot.slane %v1337, 4
      %v1339 = vrot.slane %v1106, 5
      %v1340 = vsel %vm488, %v1338, %v1339
      %v1341 = vrot.slane %v1299, 5
      %v1342 = vrot.slane %v1341, 4
      %v1343 = vrot.slane %v1108, 5
      %v1344 = vsel %vm488, %v1342, %v1343
      %v1345 = vrot.slane %v1300, 5
      %v1346 = vrot.slane %v1345, 4
      %v1347 = vrot.slane %v1110, 5
      %v1348 = vsel %vm488, %v1346, %v1347
      %s1349 = scalar_lea.vmem %s1, 64
      %v1350 = vld [vmem:[%s1349] sm:$0xf]
      %v1351 = vld [vmem:[%s1349 + $0x4] sm:$0xf]
      %v1352 = vunpack.c.l.b16 %v1320
      %v1353 = vunpack.c.l.b16 %v1324
      %v1354 = vunpack.c.l.b16 %v1328
      %v1355 = vunpack.c.l.b16 %v1332
      %v1356 = vunpack.c.l.b16 %v1336
      %v1357 = vunpack.c.l.b16 %v1340
      %v1358 = vunpack.c.l.b16 %v1344
      %v1359 = vunpack.c.l.b16 %v1348
      %v1360 = vpack.c.b16 %v1353, %v1352
      %v1361 = vpack.c.b16 %v1355, %v1354
      %v1362 = vpack.c.b16 %v1357, %v1356
      %v1363 = vpack.c.b16 %v1359, %v1358
      %v1366 = vunpack.c.l.b16 %v1350
      %v1367 = vunpack.c.l.b16 %v1351
      %v1368 = vpack.c.b16 %v1367, %v1366
      %v1371 = vsel %vm353, %v1360, 0
      %v1374 = vsel %vm353, %v1361, 0
      %v1377 = vsel %vm353, %v1362, 0
      %v1380 = vsel %vm353, %v1363, 0
      %1382 = vmatpush.bf16.msra.mxu0 0
      %1383 = vmatpush.bf16.msra.mxu0 0
      %1384 = vmatpush.bf16.msra.mxu0 0
      %1385 = vmatpush.bf16.msra.mxu0 0
      %1386 = vmatpush.bf16.msra.mxu0 0
      %1387 = vmatpush.bf16.msra.mxu0 0
      %1388 = vmatpush.bf16.msra.mxu0 0
      %1389 = vmatpush.bf16.msra.mxu0 %v1368
      %1390 = vmatmul.bf16.gmra.mxu0 %v1371
      %v1391 = vpop.f32.mrf.mxu0
      %v1392 = vadd.f32 0.0, %v1391
      %v1393 = vpop.f32.mrf.mxu0
      %v1394 = vadd.f32 0.0, %v1393
      %1395 = vmatmul.bf16.gmra.mxu0 %v1374
      %v1396 = vpop.f32.mrf.mxu0
      %v1397 = vadd.f32 0.0, %v1396
      %v1398 = vpop.f32.mrf.mxu0
      %v1399 = vadd.f32 0.0, %v1398
      %1400 = vmatmul.bf16.gmra.mxu0 %v1377
      %v1401 = vpop.f32.mrf.mxu0
      %v1402 = vadd.f32 0.0, %v1401
      %v1403 = vpop.f32.mrf.mxu0
      %v1404 = vadd.f32 0.0, %v1403
      %1405 = vmatmul.bf16.gmra.mxu0 %v1380
      %v1406 = vpop.f32.mrf.mxu0
      %v1407 = vadd.f32 0.0, %v1406
      %v1408 = vpop.f32.mrf.mxu0
      %v1409 = vadd.f32 0.0, %v1408
      %1410 = vdwg.mxu0
      %v1411 = vadd.f32 %v1285, %v1392
      %v1412 = vadd.f32 %v1286, %v1394
      %v1413 = vadd.f32 %v1287, %v1397
      %v1414 = vadd.f32 %v1288, %v1399
      %v1415 = vadd.f32 %v1289, %v1402
      %v1416 = vadd.f32 %v1290, %v1404
      %v1417 = vadd.f32 %v1291, %v1407
      %v1418 = vadd.f32 %v1292, %v1409
      %v1419 = vld [vmem:[%s2] sm:$0x1]
      %v1421 = vperm.slane %v1419, 0
      %v1423 = vadd.f32 %v1411, %v1421
      %v1424 = vadd.f32 %v1412, %v1421
      %v1425 = vadd.f32 %v1413, %v1421
      %v1426 = vadd.f32 %v1414, %v1421
      %v1427 = vadd.f32 %v1415, %v1421
      %v1428 = vadd.f32 %v1416, %v1421
      %v1429 = vadd.f32 %v1417, %v1421
      %v1430 = vadd.f32 %v1418, %v1421
      %v1431 = vmax.f32 %v1423, 0.0
      %v1432 = vmax.f32 %v1424, 0.0
      %v1433 = vmax.f32 %v1425, 0.0
      %v1434 = vmax.f32 %v1426, 0.0
      %v1435 = vmax.f32 %v1427, 0.0
      %v1436 = vmax.f32 %v1428, 0.0
      %v1437 = vmax.f32 %v1429, 0.0
      %v1438 = vmax.f32 %v1430, 0.0
      %v1439 = vpack.c.bf16 %v1431, %v1431
      %v1440 = vpack.c.bf16 %v1432, %v1432
      %v1441 = vpack.c.bf16 %v1433, %v1433
      %v1442 = vpack.c.bf16 %v1434, %v1434
      %v1443 = vpack.c.bf16 %v1435, %v1435
      %v1444 = vpack.c.bf16 %v1436, %v1436
      %v1445 = vpack.c.bf16 %v1437, %v1437
      %v1446 = vpack.c.bf16 %v1438, %v1438
      %vm1447 = vcmask 125952
      %1448 = vst.msk [vmem:[%s192] sm:$0xf] %vm1447, %v1439
      %1449 = vst.msk [vmem:[%s192 + $0x4] sm:$0xf] %vm1447, %v1440
      %1450 = vst.msk [vmem:[%s192 + $0x8] sm:$0xf] %vm1447, %v1441
      %1451 = vst.msk [vmem:[%s192 + $0xc] sm:$0xf] %vm1447, %v1442
      %1452 = vst.msk [vmem:[%s192 + $0x10] sm:$0xf] %vm1447, %v1443
      %1453 = vst.msk [vmem:[%s192 + $0x14] sm:$0xf] %vm1447, %v1444
      %1454 = vst.msk [vmem:[%s192 + $0x18] sm:$0xf] %vm1447, %v1445
      %1455 = vst.msk [vmem:[%s192 + $0x1c] sm:$0xf] %vm1447, %v1446
      %s1456 = smul.u32 8, %s19
      %p1457 = scmp.lt.s32.totalorder %s18, 1
      %s1458 = scalar_select %p1457, %s18, 1
      %p1459 = scmp.lt.s32.totalorder %s1456, 7
      %s1460 = scalar_select %p1459, %s1456, 7
      %s1461 = smul.addr %s1458, 8
      %s1462 = sadd.s32 %s1460, %s1461
      %s1463 = smul.addr %s1462, 4
      %s1464 = scalar_lea.vmem %s3, %s1463
      // Predicated region
      $region33: #{bottleneck_forward_pallas.4} parent=31 // pred_check
        %p1465 = pneg %p114
      $region34: #{bottleneck_forward_pallas.4} parent=31 // pred_check_branch
        %1467 = sbr.rel (%p1465) target = $region36
      $region35: #{bottleneck_forward_pallas.4} parent=31 // pred_region
        %s1468 = smul.u32 8, %s19
      $region36: #{bottleneck_forward_pallas.4} parent=31 // pred_fallthru
        _
    $region32: #{bottleneck_forward_pallas.4} parent=5 // pred_fallthru
      _
    %p1469 = scmp.le.s32.totalorder 2, %s9
    // Predicated region
    $region37: #{bottleneck_forward_pallas.4} parent=5 // pred_check
      %p1470 = pneg %p1469
    $region38: #{bottleneck_forward_pallas.4} parent=5 // pred_check_branch
      %1472 = sbr.rel (%p1470) target = $region40
    $region39: #{bottleneck_forward_pallas.4} parent=5 // pred_region
      %s1473 = ssub.s32 %s9, 2
      // Predicated region
      $region41: #{bottleneck_forward_pallas.4} parent=39 // pred_check
        %p1474 = pneg %p120
      $region42: #{bottleneck_forward_pallas.4} parent=39 // pred_check_branch
        %1476 = sbr.rel (%p1474) target = $region44
      $region43: #{bottleneck_forward_pallas.4} parent=39 // pred_region
        %s1477 = smul.u32 8, %s21
        %p1478 = scmp.lt.s32.totalorder %s20, 1
        %s1479 = scalar_select %p1478, %s20, 1
        %p1480 = scmp.lt.s32.totalorder %s1477, 7
        %s1481 = scalar_select %p1480, %s1477, 7
        %s1482 = smul.addr %s1479, 8
        %s1483 = sadd.s32 %s1481, %s1482
        %s1484 = smul.addr %s1483, 4
        %s1485 = scalar_lea.vmem %s3, %s1484
      $region44: #{bottleneck_forward_pallas.4} parent=39 // pred_fallthru
        _
    $region40: #{bottleneck_forward_pallas.4} parent=5 // pred_fallthru
      _
  $region6: #{bottleneck_forward_pallas.4} parent=0 // loop_footer
    %s13 = sadd.s32 1, %s9
  $region7: #{bottleneck_forward_pallas.4} parent=0 // loop_footer_branch
    %8 = sbr.rel target = $region3
  $region8: #{bottleneck_forward_pallas.4} parent=0 // loop_exit
    _

</llo_original>
